<compile_context>
chip_gen: v5e
topology: v5e:2x2
jax: 0.10.0
libtpu: 0.0.40
codegen_flags: <defaults>
</compile_context>

<pallas_src>
import functools

import jax
import jax.numpy as jnp
from jax.experimental import pallas as pl
from jax.experimental.pallas import tpu as pltpu


def _fused_bottleneck_kernel(x_ref, w1_ref, b1_ref, w2_ref, b2_ref,
                             nl_ref, nr_ref, out_ref, pad_ref, *, H, W):
    """Fused: conv3x3+BN+ReLU -> conv3x3+BN+ReLU -> residual add, one batch element.

    x_ref  : (1, C, H*W)   input, channels on sublanes, flattened H*W on lanes
    w*_ref : (9, C, C)     per-tap conv weights (BN scale folded in), [tap, c_out, c_in]
    b*_ref : (C, 1)        folded BN shift
    nl_ref : (1, H*W)      1.0 where w > 0      (valid mask for dw = -1)
    nr_ref : (1, H*W)      1.0 where w < W - 1  (valid mask for dw = +1)
    out_ref: (1, C, H*W)
    pad_ref: (C, H*W + 2*(W+1)) VMEM scratch, flat zero-padded stage input
    """
    C = x_ref.shape[1]
    HW = H * W
    PAD = W + 1                       # left/right zero border covers |dh*W + dw| <= W+1

    x = x_ref[0, :, :]                # (C, HW) lane-dense load

    # Pre-zero the padded scratch once per invocation; both stages only overwrite
    # the middle, so the borders stay zero ("padding inside the kernel").
    pad_ref[...] = jnp.zeros_like(pad_ref)

    def conv_bn_relu(inp, w_ref, b_ref):
        pad_ref[:, PAD:PAD + HW] = inp                      # stage input into the middle
        acc = jnp.zeros((C, HW), jnp.float32)               # 2 vregs, no spills
        tap = 0
        for dh in (-1, 0, 1):
            for dw in (-1, 0, 1):
                q0 = PAD + dh * W + dw                      # static lane offset
                patch = pad_ref[:, q0:q0 + HW]              # (C, HW) shifted slab
                if dw == -1:
                    patch = patch * nl_ref[...]             # mask row wrap-around
                elif dw == 1:
                    patch = patch * nr_ref[...]
                # One (C_out,C_in) x (C_in,HW) matmul per tap; weight indexed on the
                # leading dim => no misaligned sublane slices; output lane-dense.
                acc = acc + jnp.dot(w_ref[tap], patch,
                                    preferred_element_type=jnp.float32)
                tap += 1
        # BN scale already folded into the weights; only per-channel shift + ReLU.
        return jnp.maximum(acc + b_ref[...], 0.0)

    e = conv_bn_relu(x, w1_ref, b1_ref)          # ext_conv1
    e = conv_bn_relu(e, w2_ref, b2_ref)          # ext_conv2
    out_ref[0, :, :] = x + e                     # main + ext (no output activation)


def regular_bottleneck_forward(x_nchw, params, eps=1e-5):
    """Full module forward.  Input/output are NCHW like the PyTorch module."""
    B, C, H, W = x_nchw.shape
    HW = H * W
    x = x_nchw.reshape(B, C, HW).astype(jnp.float32)     # free reshape, no transpose

    def prep(w_oihw, gamma, beta, mean, var):
        scale = gamma / jnp.sqrt(var + eps)               # (C,)
        shift = (beta - mean * scale).reshape(C, 1)       # (C, 1)
        w = w_oihw * scale[:, None, None, None]           # fold BN scale into weights
        # (C_out, C_in, kh, kw) -> (tap = kh*3 + kw, C_out, C_in)
        w_taps = jnp.transpose(w, (2, 3, 0, 1)).reshape(9, C, C)
        return w_taps.astype(jnp.float32), shift.astype(jnp.float32)

    w1, b1 = prep(params["w1_oihw"], params["gamma1"], params["beta1"],
                  params["mean1"], params["var1"])
    w2, b2 = prep(params["w2_oihw"], params["gamma2"], params["beta2"],
                  params["mean2"], params["var2"])

    # Horizontal-edge validity masks over the flattened H*W axis (computed once,
    # host/XLA side, so the kernel needs no vector integer div/mod).
    wpos = jnp.arange(HW, dtype=jnp.int32) % W
    nl = (wpos != 0).astype(jnp.float32).reshape(1, HW)       # valid for dw = -1
    nr = (wpos != W - 1).astype(jnp.float32).reshape(1, HW)   # valid for dw = +1

    kernel = functools.partial(_fused_bottleneck_kernel, H=H, W=W)
    out = pl.pallas_call(
        kernel,
        out_shape=jax.ShapeDtypeStruct((B, C, HW), jnp.float32),
        grid_spec=pltpu.PrefetchScalarGridSpec(
            num_scalar_prefetch=0,
            grid=(B,),
            in_specs=[
                pl.BlockSpec((1, C, HW), lambda b: (b, 0, 0)),   # x (lane-dense)
                pl.BlockSpec((9, C, C), lambda b: (0, 0, 0)),    # w1 taps
                pl.BlockSpec((C, 1), lambda b: (0, 0)),          # shift1
                pl.BlockSpec((9, C, C), lambda b: (0, 0, 0)),    # w2 taps
                pl.BlockSpec((C, 1), lambda b: (0, 0)),          # shift2
                pl.BlockSpec((1, HW), lambda b: (0, 0)),         # left-edge mask
                pl.BlockSpec((1, HW), lambda b: (0, 0)),         # right-edge mask
            ],
            out_specs=pl.BlockSpec((1, C, HW), lambda b: (b, 0, 0)),
            scratch_shapes=[pltpu.VMEM((C, HW + 2 * (W + 1)), jnp.float32)],
        ),
        compiler_params=pltpu.CompilerParams(dimension_semantics=("parallel",)),
    )(x, w1, b1, w2, b2, nl, nr)
    return out.reshape(B, C, H, W)


# ------------------------- pure-JAX reference (for checking) -------------------------
def _ref_conv_bn_relu(x_nchw, w_oihw, gamma, beta, mean, var, eps=1e-5):
    y = jax.lax.conv_general_dilated(
        x_nchw, w_oihw, window_strides=(1, 1), padding=((1, 1), (1, 1)),
        dimension_numbers=("NCHW", "OIHW", "NCHW"))
    scale = gamma / jnp.sqrt(var + eps)
    shift = beta - mean * scale
    return jnp.maximum(y * scale.reshape(1, -1, 1, 1) + shift.reshape(1, -1, 1, 1), 0.0)


def regular_bottleneck_reference(x_nchw, params):
    x = x_nchw.astype(jnp.float32)
    e = _ref_conv_bn_relu(x, params["w1_oihw"], params["gamma1"], params["beta1"],
                          params["mean1"], params["var1"])
    e = _ref_conv_bn_relu(e, params["w2_oihw"], params["gamma2"], params["beta2"],
                          params["mean2"], params["var2"])
    return x + e


if __name__ == "__main__":
    B, C, H, W = 2, 4, 16, 16
    key = jax.random.PRNGKey(0)
    kx, k1, k2, k3, k4, k5, k6, k7, k8 = jax.random.split(key, 9)

    x = jax.random.normal(kx, (B, C, H, W), dtype=jnp.float32)   # NCHW, like PyTorch

    params = {
        # conv weights in PyTorch OIHW layout (c_out, c_in, kh, kw)
        "w1_oihw": 0.2 * jax.random.normal(k1, (C, C, 3, 3), dtype=jnp.float32),
        "w2_oihw": 0.2 * jax.random.normal(k2, (C, C, 3, 3), dtype=jnp.float32),
        "gamma1": 1.0 + 0.1 * jax.random.normal(k3, (C,), dtype=jnp.float32),
        "beta1": 0.1 * jax.random.normal(k4, (C,), dtype=jnp.float32),
        "mean1": 0.05 * jax.random.normal(k5, (C,), dtype=jnp.float32),
        "var1": 1.0 + 0.1 * jax.random.uniform(k6, (C,), dtype=jnp.float32),
        "gamma2": 1.0 + 0.1 * jax.random.normal(k7, (C,), dtype=jnp.float32),
        "beta2": 0.1 * jax.random.normal(k8, (C,), dtype=jnp.float32),
        "mean2": jnp.zeros((C,), dtype=jnp.float32),
        "var2": jnp.ones((C,), dtype=jnp.float32),
    }

    out = jax.block_until_ready(regular_bottleneck_forward(x, params))
    ref = jax.block_until_ready(regular_bottleneck_reference(x, params))

    assert out.shape == (B, C, H, W), out.shape
    max_err = float(jnp.max(jnp.abs(out - ref)))
    assert jnp.allclose(out, ref, rtol=1e-4, atol=1e-4), max_err

    print("KERNEL_OK")
</pallas_src>

<mosaic_0001>
module attributes {stable_mosaic.version = 11 : i64} {
  func.func @_fused_bottleneck_kernel(%arg0: i32, %arg1: memref<1x4x256xf32, #tpu.memory_space<vmem>>, %arg2: memref<9x4x4xf32, #tpu.memory_space<vmem>>, %arg3: memref<4x1xf32, #tpu.memory_space<vmem>>, %arg4: memref<9x4x4xf32, #tpu.memory_space<vmem>>, %arg5: memref<4x1xf32, #tpu.memory_space<vmem>>, %arg6: memref<1x256xf32, #tpu.memory_space<vmem>>, %arg7: memref<1x256xf32, #tpu.memory_space<vmem>>, %arg8: memref<1x4x256xf32, #tpu.memory_space<vmem>>, %arg9: memref<4x290xf32, #tpu.memory_space<vmem>>) attributes {dimension_semantics = [#tpu.dimension_semantics<parallel>], iteration_bounds = array<i64: 2>, scalar_prefetch = 0 : i64, scratch_operands = 1 : i64, tpu.core_type = #tpu.core_type<tc>, window_params = [{transform_indices = @transform_0, window_bounds = array<i64: 1, 4, 256>}, {pipeline_mode = #tpu.pipeline_mode<synchronous>, transform_indices = @transform_1, window_bounds = array<i64: 9, 4, 4>}, {pipeline_mode = #tpu.pipeline_mode<synchronous>, transform_indices = @transform_2, window_bounds = array<i64: 4, 1>}, {pipeline_mode = #tpu.pipeline_mode<synchronous>, transform_indices = @transform_3, window_bounds = array<i64: 9, 4, 4>}, {pipeline_mode = #tpu.pipeline_mode<synchronous>, transform_indices = @transform_4, window_bounds = array<i64: 4, 1>}, {pipeline_mode = #tpu.pipeline_mode<synchronous>, transform_indices = @transform_5, window_bounds = array<i64: 1, 256>}, {pipeline_mode = #tpu.pipeline_mode<synchronous>, transform_indices = @transform_6, window_bounds = array<i64: 1, 256>}, {transform_indices = @transform_7, window_bounds = array<i64: 1, 4, 256>}]} {
    %c0 = arith.constant 0 : index
    %c0_0 = arith.constant 0 : index
    %c0_1 = arith.constant 0 : index
    %0 = vector.load %arg1[%c0, %c0_0, %c0_1] : memref<1x4x256xf32, #tpu.memory_space<vmem>>, vector<1x4x256xf32>
    %1 = vector.shape_cast %0 : vector<1x4x256xf32> to vector<4x256xf32>
    %cst = arith.constant 0.000000e+00 : f32
    %2 = vector.broadcast %cst : f32 to vector<4x290xf32>
    %c0_2 = arith.constant 0 : index
    %c0_3 = arith.constant 0 : index
    %3 = vector.load %arg9[%c0_2, %c0_3] : memref<4x290xf32, #tpu.memory_space<vmem>>, vector<4x290xf32>
    tpu.vector_store %arg9[%c0_2, %c0_3], %2 {strides = array<i32>} : memref<4x290xf32, #tpu.memory_space<vmem>>, vector<4x290xf32>,
    %c0_4 = arith.constant 0 : index
    %c17 = arith.constant 17 : index
    %4 = vector.load %arg9[%c0_4, %c17] : memref<4x290xf32, #tpu.memory_space<vmem>>, vector<4x256xf32>
    tpu.vector_store %arg9[%c0_4, %c17], %1 {strides = array<i32>} : memref<4x290xf32, #tpu.memory_space<vmem>>, vector<4x256xf32>,
    %cst_5 = arith.constant 0.000000e+00 : f32
    %5 = vector.broadcast %cst_5 : f32 to vector<4x256xf32>
    %c0_6 = arith.constant 0 : index
    %c0_7 = arith.constant 0 : index
    %6 = vector.load %arg9[%c0_6, %c0_7] : memref<4x290xf32, #tpu.memory_space<vmem>>, vector<4x256xf32>
    %c0_8 = arith.constant 0 : index
    %c0_9 = arith.constant 0 : index
    %7 = vector.load %arg6[%c0_8, %c0_9] : memref<1x256xf32, #tpu.memory_space<vmem>>, vector<1x256xf32>
    %8 = vector.broadcast %7 : vector<1x256xf32> to vector<4x256xf32>
    %9 = arith.mulf %6, %8 : vector<4x256xf32>
    %c0_10 = arith.constant 0 : index
    %c0_11 = arith.constant 0 : index
    %c0_12 = arith.constant 0 : index
    %10 = vector.load %arg2[%c0_10, %c0_11, %c0_12] : memref<9x4x4xf32, #tpu.memory_space<vmem>>, vector<1x4x4xf32>
    %11 = vector.shape_cast %10 : vector<1x4x4xf32> to vector<4x4xf32>
    %cst_13 = arith.constant dense<0.000000e+00> : vector<4x256xf32>
    %12 = tpu.matmul %11, %9, %cst_13 {dimension_numbers = #tpu.dot_dimension_numbers<[1], [0], [0], [1], [0, 0, 1, 1], [], []>} : vector<4x4xf32>, vector<4x256xf32>, vector<4x256xf32> -> vector<4x256xf32>
    %13 = arith.addf %5, %12 : vector<4x256xf32>
    %c0_14 = arith.constant 0 : index
    %c1 = arith.constant 1 : index
    %14 = vector.load %arg9[%c0_14, %c1] : memref<4x290xf32, #tpu.memory_space<vmem>>, vector<4x256xf32>
    %c1_15 = arith.constant 1 : index
    %c0_16 = arith.constant 0 : index
    %c0_17 = arith.constant 0 : index
    %15 = vector.load %arg2[%c1_15, %c0_16, %c0_17] : memref<9x4x4xf32, #tpu.memory_space<vmem>>, vector<1x4x4xf32>
    %16 = vector.shape_cast %15 : vector<1x4x4xf32> to vector<4x4xf32>
    %cst_18 = arith.constant dense<0.000000e+00> : vector<4x256xf32>
    %17 = tpu.matmul %16, %14, %cst_18 {dimension_numbers = #tpu.dot_dimension_numbers<[1], [0], [0], [1], [0, 0, 1, 1], [], []>} : vector<4x4xf32>, vector<4x256xf32>, vector<4x256xf32> -> vector<4x256xf32>
    %18 = arith.addf %13, %17 : vector<4x256xf32>
    %c0_19 = arith.constant 0 : index
    %c2 = arith.constant 2 : index
    %19 = vector.load %arg9[%c0_19, %c2] : memref<4x290xf32, #tpu.memory_space<vmem>>, vector<4x256xf32>
    %c0_20 = arith.constant 0 : index
    %c0_21 = arith.constant 0 : index
    %20 = vector.load %arg7[%c0_20, %c0_21] : memref<1x256xf32, #tpu.memory_space<vmem>>, vector<1x256xf32>
    %21 = vector.broadcast %20 : vector<1x256xf32> to vector<4x256xf32>
    %22 = arith.mulf %19, %21 : vector<4x256xf32>
    %c2_22 = arith.constant 2 : index
    %c0_23 = arith.constant 0 : index
    %c0_24 = arith.constant 0 : index
    %23 = vector.load %arg2[%c2_22, %c0_23, %c0_24] : memref<9x4x4xf32, #tpu.memory_space<vmem>>, vector<1x4x4xf32>
    %24 = vector.shape_cast %23 : vector<1x4x4xf32> to vector<4x4xf32>
    %cst_25 = arith.constant dense<0.000000e+00> : vector<4x256xf32>
    %25 = tpu.matmul %24, %22, %cst_25 {dimension_numbers = #tpu.dot_dimension_numbers<[1], [0], [0], [1], [0, 0, 1, 1], [], []>} : vector<4x4xf32>, vector<4x256xf32>, vector<4x256xf32> -> vector<4x256xf32>
    %26 = arith.addf %18, %25 : vector<4x256xf32>
    %c0_26 = arith.constant 0 : index
    %c16 = arith.constant 16 : index
    %27 = vector.load %arg9[%c0_26, %c16] : memref<4x290xf32, #tpu.memory_space<vmem>>, vector<4x256xf32>
    %c0_27 = arith.constant 0 : index
    %c0_28 = arith.constant 0 : index
    %28 = vector.load %arg6[%c0_27, %c0_28] : memref<1x256xf32, #tpu.memory_space<vmem>>, vector<1x256xf32>
    %29 = vector.broadcast %28 : vector<1x256xf32> to vector<4x256xf32>
    %30 = arith.mulf %27, %29 : vector<4x256xf32>
    %c3 = arith.constant 3 : index
    %c0_29 = arith.constant 0 : index
    %c0_30 = arith.constant 0 : index
    %31 = vector.load %arg2[%c3, %c0_29, %c0_30] : memref<9x4x4xf32, #tpu.memory_space<vmem>>, vector<1x4x4xf32>
    %32 = vector.shape_cast %31 : vector<1x4x4xf32> to vector<4x4xf32>
    %cst_31 = arith.constant dense<0.000000e+00> : vector<4x256xf32>
    %33 = tpu.matmul %32, %30, %cst_31 {dimension_numbers = #tpu.dot_dimension_numbers<[1], [0], [0], [1], [0, 0, 1, 1], [], []>} : vector<4x4xf32>, vector<4x256xf32>, vector<4x256xf32> -> vector<4x256xf32>
    %34 = arith.addf %26, %33 : vector<4x256xf32>
    %c0_32 = arith.constant 0 : index
    %c17_33 = arith.constant 17 : index
    %35 = vector.load %arg9[%c0_32, %c17_33] : memref<4x290xf32, #tpu.memory_space<vmem>>, vector<4x256xf32>
    %c4 = arith.constant 4 : index
    %c0_34 = arith.constant 0 : index
    %c0_35 = arith.constant 0 : index
    %36 = vector.load %arg2[%c4, %c0_34, %c0_35] : memref<9x4x4xf32, #tpu.memory_space<vmem>>, vector<1x4x4xf32>
    %37 = vector.shape_cast %36 : vector<1x4x4xf32> to vector<4x4xf32>
    %cst_36 = arith.constant dense<0.000000e+00> : vector<4x256xf32>
    %38 = tpu.matmul %37, %35, %cst_36 {dimension_numbers = #tpu.dot_dimension_numbers<[1], [0], [0], [1], [0, 0, 1, 1], [], []>} : vector<4x4xf32>, vector<4x256xf32>, vector<4x256xf32> -> vector<4x256xf32>
    %39 = arith.addf %34, %38 : vector<4x256xf32>
    %c0_37 = arith.constant 0 : index
    %c18 = arith.constant 18 : index
    %40 = vector.load %arg9[%c0_37, %c18] : memref<4x290xf32, #tpu.memory_space<vmem>>, vector<4x256xf32>
    %c0_38 = arith.constant 0 : index
    %c0_39 = arith.constant 0 : index
    %41 = vector.load %arg7[%c0_38, %c0_39] : memref<1x256xf32, #tpu.memory_space<vmem>>, vector<1x256xf32>
    %42 = vector.broadcast %41 : vector<1x256xf32> to vector<4x256xf32>
    %43 = arith.mulf %40, %42 : vector<4x256xf32>
    %c5 = arith.constant 5 : index
    %c0_40 = arith.constant 0 : index
    %c0_41 = arith.constant 0 : index
    %44 = vector.load %arg2[%c5, %c0_40, %c0_41] : memref<9x4x4xf32, #tpu.memory_space<vmem>>, vector<1x4x4xf32>
    %45 = vector.shape_cast %44 : vector<1x4x4xf32> to vector<4x4xf32>
    %cst_42 = arith.constant dense<0.000000e+00> : vector<4x256xf32>
    %46 = tpu.matmul %45, %43, %cst_42 {dimension_numbers = #tpu.dot_dimension_numbers<[1], [0], [0], [1], [0, 0, 1, 1], [], []>} : vector<4x4xf32>, vector<4x256xf32>, vector<4x256xf32> -> vector<4x256xf32>
    %47 = arith.addf %39, %46 : vector<4x256xf32>
    %c0_43 = arith.constant 0 : index
    %c32 = arith.constant 32 : index
    %48 = vector.load %arg9[%c0_43, %c32] : memref<4x290xf32, #tpu.memory_space<vmem>>, vector<4x256xf32>
    %c0_44 = arith.constant 0 : index
    %c0_45 = arith.constant 0 : index
    %49 = vector.load %arg6[%c0_44, %c0_45] : memref<1x256xf32, #tpu.memory_space<vmem>>, vector<1x256xf32>
    %50 = vector.broadcast %49 : vector<1x256xf32> to vector<4x256xf32>
    %51 = arith.mulf %48, %50 : vector<4x256xf32>
    %c6 = arith.constant 6 : index
    %c0_46 = arith.constant 0 : index
    %c0_47 = arith.constant 0 : index
    %52 = vector.load %arg2[%c6, %c0_46, %c0_47] : memref<9x4x4xf32, #tpu.memory_space<vmem>>, vector<1x4x4xf32>
    %53 = vector.shape_cast %52 : vector<1x4x4xf32> to vector<4x4xf32>
    %cst_48 = arith.constant dense<0.000000e+00> : vector<4x256xf32>
    %54 = tpu.matmul %53, %51, %cst_48 {dimension_numbers = #tpu.dot_dimension_numbers<[1], [0], [0], [1], [0, 0, 1, 1], [], []>} : vector<4x4xf32>, vector<4x256xf32>, vector<4x256xf32> -> vector<4x256xf32>
    %55 = arith.addf %47, %54 : vector<4x256xf32>
    %c0_49 = arith.constant 0 : index
    %c33 = arith.constant 33 : index
    %56 = vector.load %arg9[%c0_49, %c33] : memref<4x290xf32, #tpu.memory_space<vmem>>, vector<4x256xf32>
    %c7 = arith.constant 7 : index
    %c0_50 = arith.constant 0 : index
    %c0_51 = arith.constant 0 : index
    %57 = vector.load %arg2[%c7, %c0_50, %c0_51] : memref<9x4x4xf32, #tpu.memory_space<vmem>>, vector<1x4x4xf32>
    %58 = vector.shape_cast %57 : vector<1x4x4xf32> to vector<4x4xf32>
    %cst_52 = arith.constant dense<0.000000e+00> : vector<4x256xf32>
    %59 = tpu.matmul %58, %56, %cst_52 {dimension_numbers = #tpu.dot_dimension_numbers<[1], [0], [0], [1], [0, 0, 1, 1], [], []>} : vector<4x4xf32>, vector<4x256xf32>, vector<4x256xf32> -> vector<4x256xf32>
    %60 = arith.addf %55, %59 : vector<4x256xf32>
    %c0_53 = arith.constant 0 : index
    %c34 = arith.constant 34 : index
    %61 = vector.load %arg9[%c0_53, %c34] : memref<4x290xf32, #tpu.memory_space<vmem>>, vector<4x256xf32>
    %c0_54 = arith.constant 0 : index
    %c0_55 = arith.constant 0 : index
    %62 = vector.load %arg7[%c0_54, %c0_55] : memref<1x256xf32, #tpu.memory_space<vmem>>, vector<1x256xf32>
    %63 = vector.broadcast %62 : vector<1x256xf32> to vector<4x256xf32>
    %64 = arith.mulf %61, %63 : vector<4x256xf32>
    %c8 = arith.constant 8 : index
    %c0_56 = arith.constant 0 : index
    %c0_57 = arith.constant 0 : index
    %65 = vector.load %arg2[%c8, %c0_56, %c0_57] : memref<9x4x4xf32, #tpu.memory_space<vmem>>, vector<1x4x4xf32>
    %66 = vector.shape_cast %65 : vector<1x4x4xf32> to vector<4x4xf32>
    %cst_58 = arith.constant dense<0.000000e+00> : vector<4x256xf32>
    %67 = tpu.matmul %66, %64, %cst_58 {dimension_numbers = #tpu.dot_dimension_numbers<[1], [0], [0], [1], [0, 0, 1, 1], [], []>} : vector<4x4xf32>, vector<4x256xf32>, vector<4x256xf32> -> vector<4x256xf32>
    %68 = arith.addf %60, %67 : vector<4x256xf32>
    %c0_59 = arith.constant 0 : index
    %c0_60 = arith.constant 0 : index
    %69 = vector.load %arg3[%c0_59, %c0_60] : memref<4x1xf32, #tpu.memory_space<vmem>>, vector<4x1xf32>
    %70 = vector.broadcast %69 : vector<4x1xf32> to vector<4x256xf32>
    %71 = arith.addf %68, %70 : vector<4x256xf32>
    %cst_61 = arith.constant 0.000000e+00 : f32
    %72 = vector.broadcast %cst_61 : f32 to vector<4x256xf32>
    %73 = arith.maximumf %71, %72 : vector<4x256xf32>
    %c0_62 = arith.constant 0 : index
    %c17_63 = arith.constant 17 : index
    %74 = vector.load %arg9[%c0_62, %c17_63] : memref<4x290xf32, #tpu.memory_space<vmem>>, vector<4x256xf32>
    tpu.vector_store %arg9[%c0_62, %c17_63], %73 {strides = array<i32>} : memref<4x290xf32, #tpu.memory_space<vmem>>, vector<4x256xf32>,
    %cst_64 = arith.constant 0.000000e+00 : f32
    %75 = vector.broadcast %cst_64 : f32 to vector<4x256xf32>
    %c0_65 = arith.constant 0 : index
    %c0_66 = arith.constant 0 : index
    %76 = vector.load %arg9[%c0_65, %c0_66] : memref<4x290xf32, #tpu.memory_space<vmem>>, vector<4x256xf32>
    %c0_67 = arith.constant 0 : index
    %c0_68 = arith.constant 0 : index
    %77 = vector.load %arg6[%c0_67, %c0_68] : memref<1x256xf32, #tpu.memory_space<vmem>>, vector<1x256xf32>
    %78 = vector.broadcast %77 : vector<1x256xf32> to vector<4x256xf32>
    %79 = arith.mulf %76, %78 : vector<4x256xf32>
    %c0_69 = arith.constant 0 : index
    %c0_70 = arith.constant 0 : index
    %c0_71 = arith.constant 0 : index
    %80 = vector.load %arg4[%c0_69, %c0_70, %c0_71] : memref<9x4x4xf32, #tpu.memory_space<vmem>>, vector<1x4x4xf32>
    %81 = vector.shape_cast %80 : vector<1x4x4xf32> to vector<4x4xf32>
    %cst_72 = arith.constant dense<0.000000e+00> : vector<4x256xf32>
    %82 = tpu.matmul %81, %79, %cst_72 {dimension_numbers = #tpu.dot_dimension_numbers<[1], [0], [0], [1], [0, 0, 1, 1], [], []>} : vector<4x4xf32>, vector<4x256xf32>, vector<4x256xf32> -> vector<4x256xf32>
    %83 = arith.addf %75, %82 : vector<4x256xf32>
    %c0_73 = arith.constant 0 : index
    %c1_74 = arith.constant 1 : index
    %84 = vector.load %arg9[%c0_73, %c1_74] : memref<4x290xf32, #tpu.memory_space<vmem>>, vector<4x256xf32>
    %c1_75 = arith.constant 1 : index
    %c0_76 = arith.constant 0 : index
    %c0_77 = arith.constant 0 : index
    %85 = vector.load %arg4[%c1_75, %c0_76, %c0_77] : memref<9x4x4xf32, #tpu.memory_space<vmem>>, vector<1x4x4xf32>
    %86 = vector.shape_cast %85 : vector<1x4x4xf32> to vector<4x4xf32>
    %cst_78 = arith.constant dense<0.000000e+00> : vector<4x256xf32>
    %87 = tpu.matmul %86, %84, %cst_78 {dimension_numbers = #tpu.dot_dimension_numbers<[1], [0], [0], [1], [0, 0, 1, 1], [], []>} : vector<4x4xf32>, vector<4x256xf32>, vector<4x256xf32> -> vector<4x256xf32>
    %88 = arith.addf %83, %87 : vector<4x256xf32>
    %c0_79 = arith.constant 0 : index
    %c2_80 = arith.constant 2 : index
    %89 = vector.load %arg9[%c0_79, %c2_80] : memref<4x290xf32, #tpu.memory_space<vmem>>, vector<4x256xf32>
    %c0_81 = arith.constant 0 : index
    %c0_82 = arith.constant 0 : index
    %90 = vector.load %arg7[%c0_81, %c0_82] : memref<1x256xf32, #tpu.memory_space<vmem>>, vector<1x256xf32>
    %91 = vector.broadcast %90 : vector<1x256xf32> to vector<4x256xf32>
    %92 = arith.mulf %89, %91 : vector<4x256xf32>
    %c2_83 = arith.constant 2 : index
    %c0_84 = arith.constant 0 : index
    %c0_85 = arith.constant 0 : index
    %93 = vector.load %arg4[%c2_83, %c0_84, %c0_85] : memref<9x4x4xf32, #tpu.memory_space<vmem>>, vector<1x4x4xf32>
    %94 = vector.shape_cast %93 : vector<1x4x4xf32> to vector<4x4xf32>
    %cst_86 = arith.constant dense<0.000000e+00> : vector<4x256xf32>
    %95 = tpu.matmul %94, %92, %cst_86 {dimension_numbers = #tpu.dot_dimension_numbers<[1], [0], [0], [1], [0, 0, 1, 1], [], []>} : vector<4x4xf32>, vector<4x256xf32>, vector<4x256xf32> -> vector<4x256xf32>
    %96 = arith.addf %88, %95 : vector<4x256xf32>
    %c0_87 = arith.constant 0 : index
    %c16_88 = arith.constant 16 : index
    %97 = vector.load %arg9[%c0_87, %c16_88] : memref<4x290xf32, #tpu.memory_space<vmem>>, vector<4x256xf32>
    %c0_89 = arith.constant 0 : index
    %c0_90 = arith.constant 0 : index
    %98 = vector.load %arg6[%c0_89, %c0_90] : memref<1x256xf32, #tpu.memory_space<vmem>>, vector<1x256xf32>
    %99 = vector.broadcast %98 : vector<1x256xf32> to vector<4x256xf32>
    %100 = arith.mulf %97, %99 : vector<4x256xf32>
    %c3_91 = arith.constant 3 : index
    %c0_92 = arith.constant 0 : index
    %c0_93 = arith.constant 0 : index
    %101 = vector.load %arg4[%c3_91, %c0_92, %c0_93] : memref<9x4x4xf32, #tpu.memory_space<vmem>>, vector<1x4x4xf32>
    %102 = vector.shape_cast %101 : vector<1x4x4xf32> to vector<4x4xf32>
    %cst_94 = arith.constant dense<0.000000e+00> : vector<4x256xf32>
    %103 = tpu.matmul %102, %100, %cst_94 {dimension_numbers = #tpu.dot_dimension_numbers<[1], [0], [0], [1], [0, 0, 1, 1], [], []>} : vector<4x4xf32>, vector<4x256xf32>, vector<4x256xf32> -> vector<4x256xf32>
    %104 = arith.addf %96, %103 : vector<4x256xf32>
    %c0_95 = arith.constant 0 : index
    %c17_96 = arith.constant 17 : index
    %105 = vector.load %arg9[%c0_95, %c17_96] : memref<4x290xf32, #tpu.memory_space<vmem>>, vector<4x256xf32>
    %c4_97 = arith.constant 4 : index
    %c0_98 = arith.constant 0 : index
    %c0_99 = arith.constant 0 : index
    %106 = vector.load %arg4[%c4_97, %c0_98, %c0_99] : memref<9x4x4xf32, #tpu.memory_space<vmem>>, vector<1x4x4xf32>
    %107 = vector.shape_cast %106 : vector<1x4x4xf32> to vector<4x4xf32>
    %cst_100 = arith.constant dense<0.000000e+00> : vector<4x256xf32>
    %108 = tpu.matmul %107, %105, %cst_100 {dimension_numbers = #tpu.dot_dimension_numbers<[1], [0], [0], [1], [0, 0, 1, 1], [], []>} : vector<4x4xf32>, vector<4x256xf32>, vector<4x256xf32> -> vector<4x256xf32>
    %109 = arith.addf %104, %108 : vector<4x256xf32>
    %c0_101 = arith.constant 0 : index
    %c18_102 = arith.constant 18 : index
    %110 = vector.load %arg9[%c0_101, %c18_102] : memref<4x290xf32, #tpu.memory_space<vmem>>, vector<4x256xf32>
    %c0_103 = arith.constant 0 : index
    %c0_104 = arith.constant 0 : index
    %111 = vector.load %arg7[%c0_103, %c0_104] : memref<1x256xf32, #tpu.memory_space<vmem>>, vector<1x256xf32>
    %112 = vector.broadcast %111 : vector<1x256xf32> to vector<4x256xf32>
    %113 = arith.mulf %110, %112 : vector<4x256xf32>
    %c5_105 = arith.constant 5 : index
    %c0_106 = arith.constant 0 : index
    %c0_107 = arith.constant 0 : index
    %114 = vector.load %arg4[%c5_105, %c0_106, %c0_107] : memref<9x4x4xf32, #tpu.memory_space<vmem>>, vector<1x4x4xf32>
    %115 = vector.shape_cast %114 : vector<1x4x4xf32> to vector<4x4xf32>
    %cst_108 = arith.constant dense<0.000000e+00> : vector<4x256xf32>
    %116 = tpu.matmul %115, %113, %cst_108 {dimension_numbers = #tpu.dot_dimension_numbers<[1], [0], [0], [1], [0, 0, 1, 1], [], []>} : vector<4x4xf32>, vector<4x256xf32>, vector<4x256xf32> -> vector<4x256xf32>
    %117 = arith.addf %109, %116 : vector<4x256xf32>
    %c0_109 = arith.constant 0 : index
    %c32_110 = arith.constant 32 : index
    %118 = vector.load %arg9[%c0_109, %c32_110] : memref<4x290xf32, #tpu.memory_space<vmem>>, vector<4x256xf32>
    %c0_111 = arith.constant 0 : index
    %c0_112 = arith.constant 0 : index
    %119 = vector.load %arg6[%c0_111, %c0_112] : memref<1x256xf32, #tpu.memory_space<vmem>>, vector<1x256xf32>
    %120 = vector.broadcast %119 : vector<1x256xf32> to vector<4x256xf32>
    %121 = arith.mulf %118, %120 : vector<4x256xf32>
    %c6_113 = arith.constant 6 : index
    %c0_114 = arith.constant 0 : index
    %c0_115 = arith.constant 0 : index
    %122 = vector.load %arg4[%c6_113, %c0_114, %c0_115] : memref<9x4x4xf32, #tpu.memory_space<vmem>>, vector<1x4x4xf32>
    %123 = vector.shape_cast %122 : vector<1x4x4xf32> to vector<4x4xf32>
    %cst_116 = arith.constant dense<0.000000e+00> : vector<4x256xf32>
    %124 = tpu.matmul %123, %121, %cst_116 {dimension_numbers = #tpu.dot_dimension_numbers<[1], [0], [0], [1], [0, 0, 1, 1], [], []>} : vector<4x4xf32>, vector<4x256xf32>, vector<4x256xf32> -> vector<4x256xf32>
    %125 = arith.addf %117, %124 : vector<4x256xf32>
    %c0_117 = arith.constant 0 : index
    %c33_118 = arith.constant 33 : index
    %126 = vector.load %arg9[%c0_117, %c33_118] : memref<4x290xf32, #tpu.memory_space<vmem>>, vector<4x256xf32>
    %c7_119 = arith.constant 7 : index
    %c0_120 = arith.constant 0 : index
    %c0_121 = arith.constant 0 : index
    %127 = vector.load %arg4[%c7_119, %c0_120, %c0_121] : memref<9x4x4xf32, #tpu.memory_space<vmem>>, vector<1x4x4xf32>
    %128 = vector.shape_cast %127 : vector<1x4x4xf32> to vector<4x4xf32>
    %cst_122 = arith.constant dense<0.000000e+00> : vector<4x256xf32>
    %129 = tpu.matmul %128, %126, %cst_122 {dimension_numbers = #tpu.dot_dimension_numbers<[1], [0], [0], [1], [0, 0, 1, 1], [], []>} : vector<4x4xf32>, vector<4x256xf32>, vector<4x256xf32> -> vector<4x256xf32>
    %130 = arith.addf %125, %129 : vector<4x256xf32>
    %c0_123 = arith.constant 0 : index
    %c34_124 = arith.constant 34 : index
    %131 = vector.load %arg9[%c0_123, %c34_124] : memref<4x290xf32, #tpu.memory_space<vmem>>, vector<4x256xf32>
    %c0_125 = arith.constant 0 : index
    %c0_126 = arith.constant 0 : index
    %132 = vector.load %arg7[%c0_125, %c0_126] : memref<1x256xf32, #tpu.memory_space<vmem>>, vector<1x256xf32>
    %133 = vector.broadcast %132 : vector<1x256xf32> to vector<4x256xf32>
    %134 = arith.mulf %131, %133 : vector<4x256xf32>
    %c8_127 = arith.constant 8 : index
    %c0_128 = arith.constant 0 : index
    %c0_129 = arith.constant 0 : index
    %135 = vector.load %arg4[%c8_127, %c0_128, %c0_129] : memref<9x4x4xf32, #tpu.memory_space<vmem>>, vector<1x4x4xf32>
    %136 = vector.shape_cast %135 : vector<1x4x4xf32> to vector<4x4xf32>
    %cst_130 = arith.constant dense<0.000000e+00> : vector<4x256xf32>
    %137 = tpu.matmul %136, %134, %cst_130 {dimension_numbers = #tpu.dot_dimension_numbers<[1], [0], [0], [1], [0, 0, 1, 1], [], []>} : vector<4x4xf32>, vector<4x256xf32>, vector<4x256xf32> -> vector<4x256xf32>
    %138 = arith.addf %130, %137 : vector<4x256xf32>
    %c0_131 = arith.constant 0 : index
    %c0_132 = arith.constant 0 : index
    %139 = vector.load %arg5[%c0_131, %c0_132] : memref<4x1xf32, #tpu.memory_space<vmem>>, vector<4x1xf32>
    %140 = vector.broadcast %139 : vector<4x1xf32> to vector<4x256xf32>
    %141 = arith.addf %138, %140 : vector<4x256xf32>
    %cst_133 = arith.constant 0.000000e+00 : f32
    %142 = vector.broadcast %cst_133 : f32 to vector<4x256xf32>
    %143 = arith.maximumf %141, %142 : vector<4x256xf32>
    %144 = arith.addf %1, %143 : vector<4x256xf32>
    %c0_134 = arith.constant 0 : index
    %c0_135 = arith.constant 0 : index
    %c0_136 = arith.constant 0 : index
    %145 = vector.load %arg8[%c0_134, %c0_135, %c0_136] : memref<1x4x256xf32, #tpu.memory_space<vmem>>, vector<1x4x256xf32>
    %146 = vector.shape_cast %145 : vector<1x4x256xf32> to vector<4x256xf32>
    %147 = vector.shape_cast %144 : vector<4x256xf32> to vector<1x4x256xf32>
    tpu.vector_store %arg8[%c0_134, %c0_135, %c0_136], %147 {strides = array<i32>} : memref<1x4x256xf32, #tpu.memory_space<vmem>>, vector<1x4x256xf32>,
    return
  }
  func.func @transform_0(%arg0: i32) -> (i32, i32, i32) {
    %c0_i32 = arith.constant 0 : i32
    %c0_i32_0 = arith.constant 0 : i32
    %c0_i32_1 = arith.constant 0 : i32
    return %arg0, %c0_i32, %c0_i32_0 : i32, i32, i32
  }
  func.func @transform_1(%arg0: i32) -> (i32, i32, i32) {
    %c0_i32 = arith.constant 0 : i32
    %c0_i32_0 = arith.constant 0 : i32
    %c0_i32_1 = arith.constant 0 : i32
    %c0_i32_2 = arith.constant 0 : i32
    return %c0_i32, %c0_i32_0, %c0_i32_1 : i32, i32, i32
  }
  func.func @transform_2(%arg0: i32) -> (i32, i32) {
    %c0_i32 = arith.constant 0 : i32
    %c0_i32_0 = arith.constant 0 : i32
    %c0_i32_1 = arith.constant 0 : i32
    return %c0_i32, %c0_i32_0 : i32, i32
  }
  func.func @transform_3(%arg0: i32) -> (i32, i32, i32) {
    %c0_i32 = arith.constant 0 : i32
    %c0_i32_0 = arith.constant 0 : i32
    %c0_i32_1 = arith.constant 0 : i32
    %c0_i32_2 = arith.constant 0 : i32
    return %c0_i32, %c0_i32_0, %c0_i32_1 : i32, i32, i32
  }
  func.func @transform_4(%arg0: i32) -> (i32, i32) {
    %c0_i32 = arith.constant 0 : i32
    %c0_i32_0 = arith.constant 0 : i32
    %c0_i32_1 = arith.constant 0 : i32
    return %c0_i32, %c0_i32_0 : i32, i32
  }
  func.func @transform_5(%arg0: i32) -> (i32, i32) {
    %c0_i32 = arith.constant 0 : i32
    %c0_i32_0 = arith.constant 0 : i32
    %c0_i32_1 = arith.constant 0 : i32
    return %c0_i32, %c0_i32_0 : i32, i32
  }
  func.func @transform_6(%arg0: i32) -> (i32, i32) {
    %c0_i32 = arith.constant 0 : i32
    %c0_i32_0 = arith.constant 0 : i32
    %c0_i32_1 = arith.constant 0 : i32
    return %c0_i32, %c0_i32_0 : i32, i32
  }
  func.func @transform_7(%arg0: i32) -> (i32, i32, i32) {
    %c0_i32 = arith.constant 0 : i32
    %c0_i32_0 = arith.constant 0 : i32
    %c0_i32_1 = arith.constant 0 : i32
    return %arg0, %c0_i32, %c0_i32_0 : i32, i32, i32
  }
}

</mosaic_0001>

<llo_original>
// kernel: tpu_custom_call.1
$region0: #{tpu_custom_call.1}
  #allocation0 [shape = 'u32[]', space=smem, size = 0x4, offset = 0x4, fixed_abs, tag = 'smem constant byte address 0x4 - core index']
  #allocation1 [shape = 'u32[72,128]{1,0:T(1,128)}', space=vmem, size = 0x9000, scoped, tag = 'internal scratch']
  #allocation2 [shape = 'f32[4,290]{1,0:T(4,128)}', space=vmem, size = 0x1800, scoped, tag = 'scratch operand']
  %s0 = inlined_call_operand.vmem [shape: f32[2,4,256], index: 0, kind: input, shape index: {}]
  %s1 = inlined_call_operand.vmem [shape: f32[9,4,4], index: 1, kind: input, shape index: {}]
  %s2 = inlined_call_operand.vmem [shape: f32[4,1], index: 2, kind: input, shape index: {}]
  %s3 = inlined_call_operand.vmem [shape: f32[9,4,4], index: 3, kind: input, shape index: {}]
  %s4 = inlined_call_operand.vmem [shape: f32[4,1], index: 4, kind: input, shape index: {}]
  %s5 = inlined_call_operand.vmem [shape: f32[1,256], index: 5, kind: input, shape index: {}]
  %s6 = inlined_call_operand.vmem [shape: f32[1,256], index: 6, kind: input, shape index: {}]
  %s7 = inlined_call_operand.hbm [shape: f32[2,4,256], index: 7, kind: output, shape index: {}]
  %s8 = sld [smem:[#allocation0]]
  $region61: #{tpu_custom_call.1} parent=0
    _
  %s10 = ssub.s32 1, %s8
  %s11 = scalar_select 0, %s10, %s8
  $region1: #{tpu_custom_call.1} parent=0
    #allocation3 [shape = 'u8[8192]{0}', space=vmem, size = 0x2000, scoped, tag = 'output window, operand 0']
    #allocation4 [shape = 's32[2]{0}', space=sflag, size = 0x8, scoped, tag = 'scoped memory for tpu_custom_call.1']
    %12 = vsyncpa [#allocation4], 0
    %s13 = scalar_lea.sflag [#allocation4], 1
    %14 = vsyncpa %s13, 0
    loop: start=0, step=1, limit=4
    $region2: #{tpu_custom_call.1} parent=1 // loop_pre_header
      _
    $region3: #{tpu_custom_call.1} parent=1 // loop_header
      %s16 = sphi 0, %s20
      %p17 = scmp.ge.s32.totalorder %s16, 4
      %s26 = sphi 0, %s28
      %s29 = sphi 0, %s26
      %s30 = sphi 0, %s29
      %s46 = sphi 0, %s30
      %s50 = sphi 0, %s50
      %s52 = sphi 0, %s50
      %s53 = sphi 0, %s52
      %s67 = sphi 0, %s53
      %s71 = sphi 0, %s71
      %s73 = sphi 0, %s71
      %s74 = sphi 0, %s73
      %s88 = sphi 0, %s74
      %s92 = sphi 0, %s92
      %s94 = sphi 0, %s92
      %s95 = sphi 0, %s94
      %s109 = sphi 0, %s95
      %s113 = sphi 0, %s113
      %s115 = sphi 0, %s113
      %s116 = sphi 0, %s115
      %s130 = sphi 0, %s116
      %s134 = sphi 0, %s134
      %s136 = sphi 0, %s134
      %s137 = sphi 0, %s136
      %s151 = sphi 0, %s137
      %s155 = sphi 0, %s155
      %s157 = sphi 0, %s155
      %s158 = sphi 0, %s157
      %s172 = sphi 0, %s158
      %s178 = sphi 0, %s180
      %s181 = sphi 0, %s178
      %s182 = sphi 0, %s181
      %s198 = sphi 0, %s182
    $region4: #{tpu_custom_call.1} parent=1 // loop_header_branch
      %19 = sbr.rel (%p17) target = $region8
    $region5: #{tpu_custom_call.1} parent=1 // loop_body
      %s21 = ssub.s32 %s16, 1
      %s22 = ssub.s32 %s16, 2
      %s23 = sadd.s32 %s16, 1
      %s24 = ssub.s32 %s16, %s23
      %p25 = scmp.eq.s32.totalorder %s24, 0
      %s27 = sadd.s32 %s26, 1
      %s28 = scalar_select %p25, %s26, %s27
      %p31 = pneg %p25
      %p32 = scmp.eq.s32.totalorder %s16, 1
      %p33 = por %p31, %p32
      %p34 = scmp.ne.s32.totalorder %s26, %s29
      %p35 = scmp.eq.s32.totalorder %s16, 0
      %p36 = por %p34, %p35
      %p37 = scmp.ne.s32.totalorder %s26, %s29
      %p38 = scmp.eq.s32.totalorder %s21, 1
      %p39 = por %p37, %p38
      %p40 = scmp.ne.s32.totalorder %s29, %s30
      %p41 = scmp.eq.s32.totalorder %s21, 0
      %p42 = por %p40, %p41
      %p43 = scmp.ne.s32.totalorder %s29, %s30
      %p44 = scmp.eq.s32.totalorder %s22, 1
      %p45 = por %p43, %p44
      %p47 = scmp.ne.s32.totalorder %s30, %s46
      %p48 = scmp.eq.s32.totalorder %s22, 0
      %p49 = por %p47, %p48
      %s51 = sadd.s32 %s50, 1
      %p54 = scmp.eq.s32.totalorder %s16, 1
      %p55 = scmp.ne.s32.totalorder %s50, %s52
      %p56 = scmp.eq.s32.totalorder %s16, 0
      %p57 = por %p55, %p56
      %p58 = scmp.ne.s32.totalorder %s50, %s52
      %p59 = scmp.eq.s32.totalorder %s21, 1
      %p60 = por %p58, %p59
      %p61 = scmp.ne.s32.totalorder %s52, %s53
      %p62 = scmp.eq.s32.totalorder %s21, 0
      %p63 = por %p61, %p62
      %p64 = scmp.ne.s32.totalorder %s52, %s53
      %p65 = scmp.eq.s32.totalorder %s22, 1
      %p66 = por %p64, %p65
      %p68 = scmp.ne.s32.totalorder %s53, %s67
      %p69 = scmp.eq.s32.totalorder %s22, 0
      %p70 = por %p68, %p69
      %s72 = sadd.s32 %s71, 1
      %p75 = scmp.eq.s32.totalorder %s16, 1
      %p76 = scmp.ne.s32.totalorder %s71, %s73
      %p77 = scmp.eq.s32.totalorder %s16, 0
      %p78 = por %p76, %p77
      %p79 = scmp.ne.s32.totalorder %s71, %s73
      %p80 = scmp.eq.s32.totalorder %s21, 1
      %p81 = por %p79, %p80
      %p82 = scmp.ne.s32.totalorder %s73, %s74
      %p83 = scmp.eq.s32.totalorder %s21, 0
      %p84 = por %p82, %p83
      %p85 = scmp.ne.s32.totalorder %s73, %s74
      %p86 = scmp.eq.s32.totalorder %s22, 1
      %p87 = por %p85, %p86
      %p89 = scmp.ne.s32.totalorder %s74, %s88
      %p90 = scmp.eq.s32.totalorder %s22, 0
      %p91 = por %p89, %p90
      %s93 = sadd.s32 %s92, 1
      %p96 = scmp.eq.s32.totalorder %s16, 1
      %p97 = scmp.ne.s32.totalorder %s92, %s94
      %p98 = scmp.eq.s32.totalorder %s16, 0
      %p99 = por %p97, %p98
      %p100 = scmp.ne.s32.totalorder %s92, %s94
      %p101 = scmp.eq.s32.totalorder %s21, 1
      %p102 = por %p100, %p101
      %p103 = scmp.ne.s32.totalorder %s94, %s95
      %p104 = scmp.eq.s32.totalorder %s21, 0
      %p105 = por %p103, %p104
      %p106 = scmp.ne.s32.totalorder %s94, %s95
      %p107 = scmp.eq.s32.totalorder %s22, 1
      %p108 = por %p106, %p107
      %p110 = scmp.ne.s32.totalorder %s95, %s109
      %p111 = scmp.eq.s32.totalorder %s22, 0
      %p112 = por %p110, %p111
      %s114 = sadd.s32 %s113, 1
      %p117 = scmp.eq.s32.totalorder %s16, 1
      %p118 = scmp.ne.s32.totalorder %s113, %s115
      %p119 = scmp.eq.s32.totalorder %s16, 0
      %p120 = por %p118, %p119
      %p121 = scmp.ne.s32.totalorder %s113, %s115
      %p122 = scmp.eq.s32.totalorder %s21, 1
      %p123 = por %p121, %p122
      %p124 = scmp.ne.s32.totalorder %s115, %s116
      %p125 = scmp.eq.s32.totalorder %s21, 0
      %p126 = por %p124, %p125
      %p127 = scmp.ne.s32.totalorder %s115, %s116
      %p128 = scmp.eq.s32.totalorder %s22, 1
      %p129 = por %p127, %p128
      %p131 = scmp.ne.s32.totalorder %s116, %s130
      %p132 = scmp.eq.s32.totalorder %s22, 0
      %p133 = por %p131, %p132
      %s135 = sadd.s32 %s134, 1
      %p138 = scmp.eq.s32.totalorder %s16, 1
      %p139 = scmp.ne.s32.totalorder %s134, %s136
      %p140 = scmp.eq.s32.totalorder %s16, 0
      %p141 = por %p139, %p140
      %p142 = scmp.ne.s32.totalorder %s134, %s136
      %p143 = scmp.eq.s32.totalorder %s21, 1
      %p144 = por %p142, %p143
      %p145 = scmp.ne.s32.totalorder %s136, %s137
      %p146 = scmp.eq.s32.totalorder %s21, 0
      %p147 = por %p145, %p146
      %p148 = scmp.ne.s32.totalorder %s136, %s137
      %p149 = scmp.eq.s32.totalorder %s22, 1
      %p150 = por %p148, %p149
      %p152 = scmp.ne.s32.totalorder %s137, %s151
      %p153 = scmp.eq.s32.totalorder %s22, 0
      %p154 = por %p152, %p153
      %s156 = sadd.s32 %s155, 1
      %p159 = scmp.eq.s32.totalorder %s16, 1
      %p160 = scmp.ne.s32.totalorder %s155, %s157
      %p161 = scmp.eq.s32.totalorder %s16, 0
      %p162 = por %p160, %p161
      %p163 = scmp.ne.s32.totalorder %s155, %s157
      %p164 = scmp.eq.s32.totalorder %s21, 1
      %p165 = por %p163, %p164
      %p166 = scmp.ne.s32.totalorder %s157, %s158
      %p167 = scmp.eq.s32.totalorder %s21, 0
      %p168 = por %p166, %p167
      %p169 = scmp.ne.s32.totalorder %s157, %s158
      %p170 = scmp.eq.s32.totalorder %s22, 1
      %p171 = por %p169, %p170
      %p173 = scmp.ne.s32.totalorder %s158, %s172
      %p174 = scmp.eq.s32.totalorder %s22, 0
      %p175 = por %p173, %p174
      %s176 = ssub.s32 %s16, %s23
      %p177 = scmp.eq.s32.totalorder %s176, 0
      %s179 = sadd.s32 %s178, 1
      %s180 = scalar_select %p177, %s178, %s179
      %p183 = pneg %p177
      %p184 = scmp.eq.s32.totalorder %s16, 1
      %p185 = por %p183, %p184
      %p186 = scmp.ne.s32.totalorder %s178, %s181
      %p187 = scmp.eq.s32.totalorder %s16, 0
      %p188 = por %p186, %p187
      %p189 = scmp.ne.s32.totalorder %s178, %s181
      %p190 = scmp.eq.s32.totalorder %s21, 1
      %p191 = por %p189, %p190
      %p192 = scmp.ne.s32.totalorder %s181, %s182
      %p193 = scmp.eq.s32.totalorder %s21, 0
      %p194 = por %p192, %p193
      %p195 = scmp.ne.s32.totalorder %s181, %s182
      %p196 = scmp.eq.s32.totalorder %s22, 1
      %p197 = por %p195, %p196
      %p199 = scmp.ne.s32.totalorder %s182, %s198
      %p200 = scmp.eq.s32.totalorder %s22, 0
      %p201 = por %p199, %p200
      %p202 = scmp.le.s32.totalorder 1, %s16
      %p203 = scmp.lt.s32.totalorder %s16, 3
      %p204 = pnand %p202, %p203
      %p205 = pneg %p204
      // Predicated region
      $region9: #{tpu_custom_call.1} parent=5 // pred_check
        _
      $region10: #{tpu_custom_call.1} parent=5 // pred_check_branch
        %207 = sbr.rel (%p204) target = $region12
      $region11: #{tpu_custom_call.1} parent=5 // pred_region
        %s208 = ssub.s32 %s16, 1
        // Predicated region
        $region13: #{tpu_custom_call.1} parent=11 // pred_check
          %p209 = pneg %p63
        $region14: #{tpu_custom_call.1} parent=11 // pred_check_branch
          %211 = sbr.rel (%p209) target = $region16
        $region15: #{tpu_custom_call.1} parent=11 // pred_region
          _
        $region16: #{tpu_custom_call.1} parent=11 // pred_fallthru
          _
        // Predicated region
        $region17: #{tpu_custom_call.1} parent=11 // pred_check
          %p212 = pneg %p84
        $region18: #{tpu_custom_call.1} parent=11 // pred_check_branch
          %214 = sbr.rel (%p212) target = $region20
        $region19: #{tpu_custom_call.1} parent=11 // pred_region
          _
        $region20: #{tpu_custom_call.1} parent=11 // pred_fallthru
          _
        // Predicated region
        $region21: #{tpu_custom_call.1} parent=11 // pred_check
          %p215 = pneg %p105
        $region22: #{tpu_custom_call.1} parent=11 // pred_check_branch
          %217 = sbr.rel (%p215) target = $region24
        $region23: #{tpu_custom_call.1} parent=11 // pred_region
          _
        $region24: #{tpu_custom_call.1} parent=11 // pred_fallthru
          _
        // Predicated region
        $region25: #{tpu_custom_call.1} parent=11 // pred_check
          %p218 = pneg %p126
        $region26: #{tpu_custom_call.1} parent=11 // pred_check_branch
          %220 = sbr.rel (%p218) target = $region28
        $region27: #{tpu_custom_call.1} parent=11 // pred_region
          _
        $region28: #{tpu_custom_call.1} parent=11 // pred_fallthru
          _
        // Predicated region
        $region29: #{tpu_custom_call.1} parent=11 // pred_check
          %p221 = pneg %p147
        $region30: #{tpu_custom_call.1} parent=11 // pred_check_branch
          %223 = sbr.rel (%p221) target = $region32
        $region31: #{tpu_custom_call.1} parent=11 // pred_region
          _
        $region32: #{tpu_custom_call.1} parent=11 // pred_fallthru
          _
        // Predicated region
        $region33: #{tpu_custom_call.1} parent=11 // pred_check
          %p224 = pneg %p168
        $region34: #{tpu_custom_call.1} parent=11 // pred_check_branch
          %226 = sbr.rel (%p224) target = $region36
        $region35: #{tpu_custom_call.1} parent=11 // pred_region
          _
        $region36: #{tpu_custom_call.1} parent=11 // pred_fallthru
          _
      $region12: #{tpu_custom_call.1} parent=5 // pred_fallthru
        _
      %p227 = scmp.lt.s32.totalorder %s16, 2
      // Predicated region
      $region37: #{tpu_custom_call.1} parent=5 // pred_check
        %p228 = pneg %p227
      $region38: #{tpu_custom_call.1} parent=5 // pred_check_branch
        %230 = sbr.rel (%p228) target = $region40
      $region39: #{tpu_custom_call.1} parent=5 // pred_region
        // Predicated region
        $region41: #{tpu_custom_call.1} parent=39 // pred_check
          %p231 = pneg %p36
        $region42: #{tpu_custom_call.1} parent=39 // pred_check_branch
          %233 = sbr.rel (%p231) target = $region44
        $region43: #{tpu_custom_call.1} parent=39 // pred_region
          %p234 = scmp.lt.s32.totalorder %s16, 1
          %s235 = scalar_select %p234, %s16, 1
          %s236 = smul.addr %s235, 2
          %s237 = smul.addr %s236, 4
          %s238 = scalar_lea.vmem %s0, %s237
        $region44: #{tpu_custom_call.1} parent=39 // pred_fallthru
          _
      $region40: #{tpu_custom_call.1} parent=5 // pred_fallthru
        _
      %p239 = scmp.le.s32.totalorder 1, %s16
      %p240 = scmp.lt.s32.totalorder %s16, 3
      %p241 = pnand %p239, %p240
      %p242 = pneg %p241
      // Predicated region
      $region45: #{tpu_custom_call.1} parent=5 // pred_check
        _
      $region46: #{tpu_custom_call.1} parent=5 // pred_check_branch
        %244 = sbr.rel (%p241) target = $region48
      $region47: #{tpu_custom_call.1} parent=5 // pred_region
        %s245 = ssub.s32 %s16, 1
        %p246 = scmp.lt.s32.totalorder %s21, 1
        %s247 = scalar_select %p246, %s21, 1
        %s248 = smul.addr %s247, 2
        %s249 = smul.addr %s248, 4
        %s250 = scalar_lea.vmem %s0, %s249
        %p251 = pneg %p42
        %p252 = pneg %p39
        %p253 = pneg %p63
        %p254 = pneg %p60
        %p255 = pneg %p84
        %p256 = pneg %p81
        %p257 = pneg %p105
        %p258 = pneg %p102
        %p259 = pneg %p126
        %p260 = pneg %p123
        %p261 = pneg %p147
        %p262 = pneg %p144
        %p263 = pneg %p168
        %p264 = pneg %p165
        %p265 = pneg %p194
        %p266 = pneg %p191
        %s267 = sand.u32 %s181, 1
        %s268 = scalar_lea.sflag [#allocation4], %s267
        %s269 = sand.u32 %s181, 1
        %s270 = smul.addr %s269, 8
        %s271 = scalar_lea.vmem [#allocation3], %s270
        %p272 = scmp.lt.s32.totalorder %s21, 1
        %s273 = scalar_select %p272, %s21, 1
        %s274 = smul.addr %s273, 2
        %s275 = smul.addr %s274, 4
        %s276 = scalar_lea.vmem %s0, %s275
        %v277 = vld [vmem:[%s276] sm:$0xff]
        %278 = vst [vmem:[#allocation2] sm:$0xff] 0.0
        %vm279 = vcmask 273408
        %280 = vst.msk [vmem:[#allocation2 + $0x8] sm:$0xf] %vm279, 0.0
        %282 = vrot.lane.b32.xlu0 %v277, 17
        %v283 = vpop.permute.xlu0 %282
        %v284 = vrot.slane %v283, 4
        %vm285 = vcmask 138240
        %v286 = vsel %vm285, %v284, %v283
        %vm289 = vcmask 1043592
        %vm290 = vcmask 1047556
        %vm291 = vmor %vm290, %vm289
        %292 = vst.msk [vmem:[#allocation2] sm:$0xff] %vm291, %v286
        %vm293 = vcmask 134144
        %294 = vst.msk [vmem:[#allocation2 + $0x8] sm:$0xf] %vm293, %v284
        %v295 = vld [vmem:[#allocation2] sm:$0xff]
        %v296 = vld [vmem:[%s5] sm:$0x3]
        %v298 = vperm.slane %v296, 0
        %v299 = vperm.slane %v296, 1
        %v300 = vrot.slane %v299, 4
        %vm301 = vcmask 1043456
        %v302 = vsel %vm301, %v298, %v300
        %v304 = vmul.f32 %v295, %v302
        %v305 = vld [vmem:[%s1] sm:$0xf]
        %v306 = vld [vmem:[#allocation2 + $0x8] sm:$0xf]
        %s307 = scalar_lea.vmem %s1, 4
        %v308 = vld [vmem:[%s307] sm:$0xf]
        %311 = vst [vmem:[#allocation1] ss:$2 sm:$0xff] %v295
        %s312 = scalar_lea.vmem [#allocation1], 16
        %313 = vst [vmem:[%s312] ss:$2 sm:$0xff] %v306
        %v314 = vld.sshfl [vmem:[#allocation1] sm:$0xff pattern:$0x75316420]
        %v315 = vld.sshfl [vmem:[#allocation1 + $0x8] sm:$0xff pattern:$0x75316420]
        %v316 = vld.sshfl [vmem:[#allocation1 + $0x10] sm:$0xff pattern:$0x75316420]
        %317 = vrot.lane.b32.xlu0 %v314, 127
        %v318 = vpop.permute.xlu0 %317
        %319 = vrot.lane.b32.xlu0 %v315, 127
        %v320 = vpop.permute.xlu0 %319
        %321 = vrot.lane.b32.xlu0 %v316, 127
        %v322 = vpop.permute.xlu0 %321
        %vm323 = vcmask 1039360
        %v324 = vsel %vm323, %v318, %v320
        %v325 = vsel %vm323, %v320, %v322
        %vm326 = vcmask 31744
        %v328 = vsel %vm326, %v308, 0
        %v330 = vsel %vm301, %v324, 0
        %v332 = vsel %vm301, %v325, 0
        %334 = vmatpush.msra.mxu0 0.0
        %335 = vmatpush.msra.mxu0 0.0
        %336 = vmatpush.msra.mxu0 0.0
        %337 = vmatpush.msra.mxu0 0.0
        %338 = vmatpush.msra.mxu0 0.0
        %339 = vmatpush.msra.mxu0 0.0
        %340 = vmatpush.msra.mxu0 0.0
        %341 = vmatpush.msra.mxu0 0.0
        %342 = vmatpush.msra.mxu0 0.0
        %343 = vmatpush.msra.mxu0 0.0
        %344 = vmatpush.msra.mxu0 0.0
        %345 = vmatpush.msra.mxu0 0.0
        %346 = vmatpush.msra.mxu0 0.0
        %347 = vmatpush.msra.mxu0 0.0
        %348 = vmatpush.msra.mxu0 0.0
        %349 = vmatpush.msra.mxu0 %v330
        %350 = vmatmul.f32.gmra.mxu0 %v328
        %v351 = vpop.f32.mrf.mxu0
        %v352 = vadd.f32 0.0, %v351
        %353 = vdwg.mxu0
        %354 = vmatpush.msra.mxu0 0.0
        %355 = vmatpush.msra.mxu0 0.0
        %356 = vmatpush.msra.mxu0 0.0
        %357 = vmatpush.msra.mxu0 0.0
        %358 = vmatpush.msra.mxu0 0.0
        %359 = vmatpush.msra.mxu0 0.0
        %360 = vmatpush.msra.mxu0 0.0
        %361 = vmatpush.msra.mxu0 0.0
        %362 = vmatpush.msra.mxu0 0.0
        %363 = vmatpush.msra.mxu0 0.0
        %364 = vmatpush.msra.mxu0 0.0
        %365 = vmatpush.msra.mxu0 0.0
        %366 = vmatpush.msra.mxu0 0.0
        %367 = vmatpush.msra.mxu0 0.0
        %368 = vmatpush.msra.mxu0 0.0
        %369 = vmatpush.msra.mxu0 %v332
        %370 = vmatmul.f32.gmra.mxu0 %v328
        %v371 = vpop.f32.mrf.mxu0
        %v372 = vadd.f32 0.0, %v371
        %373 = vdwg.mxu0
        %375 = vst [vmem:[#allocation1] ss:$2 sm:$0xff] %v304
        %v376 = vld.sshfl [vmem:[#allocation1] sm:$0xff pattern:$0x75316420]
        %v377 = vld.sshfl [vmem:[#allocation1 + $0x8] sm:$0xff pattern:$0x75316420]
        %v379 = vsel %vm326, %v305, 0
        %v381 = vsel %vm301, %v376, 0
        %v383 = vsel %vm301, %v377, 0
        %385 = vmatpush.msra.mxu0 0.0
        %386 = vmatpush.msra.mxu0 0.0
        %387 = vmatpush.msra.mxu0 0.0
        %388 = vmatpush.msra.mxu0 0.0
        %389 = vmatpush.msra.mxu0 0.0
        %390 = vmatpush.msra.mxu0 0.0
        %391 = vmatpush.msra.mxu0 0.0
        %392 = vmatpush.msra.mxu0 0.0
        %393 = vmatpush.msra.mxu0 0.0
        %394 = vmatpush.msra.mxu0 0.0
        %395 = vmatpush.msra.mxu0 0.0
        %396 = vmatpush.msra.mxu0 0.0
        %397 = vmatpush.msra.mxu0 0.0
        %398 = vmatpush.msra.mxu0 0.0
        %399 = vmatpush.msra.mxu0 0.0
        %400 = vmatpush.msra.mxu0 %v381
        %401 = vmatmul.f32.gmra.mxu0 %v379
        %v402 = vpop.f32.mrf.mxu0
        %v403 = vadd.f32 %v352, %v402
        %404 = vdwg.mxu0
        %405 = vmatpush.msra.mxu0 0.0
        %406 = vmatpush.msra.mxu0 0.0
        %407 = vmatpush.msra.mxu0 0.0
        %408 = vmatpush.msra.mxu0 0.0
        %409 = vmatpush.msra.mxu0 0.0
        %410 = vmatpush.msra.mxu0 0.0
        %411 = vmatpush.msra.mxu0 0.0
        %412 = vmatpush.msra.mxu0 0.0
        %413 = vmatpush.msra.mxu0 0.0
        %414 = vmatpush.msra.mxu0 0.0
        %415 = vmatpush.msra.mxu0 0.0
        %416 = vmatpush.msra.mxu0 0.0
        %417 = vmatpush.msra.mxu0 0.0
        %418 = vmatpush.msra.mxu0 0.0
        %419 = vmatpush.msra.mxu0 0.0
        %420 = vmatpush.msra.mxu0 %v383
        %421 = vmatmul.f32.gmra.mxu0 %v379
        %v422 = vpop.f32.mrf.mxu0
        %v423 = vadd.f32 %v372, %v422
        %424 = vdwg.mxu0
        %v425 = vld [vmem:[#allocation2] sm:$0xff]
        %v426 = vld [vmem:[#allocation2 + $0x8] sm:$0xf]
        %v427 = vld [vmem:[%s6] sm:$0x3]
        %v429 = vperm.slane %v427, 0
        %v430 = vperm.slane %v427, 1
        %v431 = vrot.slane %v430, 4
        %v432 = vsel %vm301, %v429, %v431
        %433 = vrot.lane.b32.xlu0 %v432, 2
        %v434 = vpop.permute.xlu0 %433
        %v435 = vrot.slane %v434, 4
        %vm436 = vcmask 15360
        %v437 = vsel %vm436, %v435, %v434
        %v440 = vmul.f32 %v425, %v437
        %v441 = vmul.f32 %v426, %v435
        %s442 = scalar_lea.vmem %s1, 8
        %v443 = vld [vmem:[%s442] sm:$0xf]
        %446 = vst [vmem:[#allocation1] ss:$2 sm:$0xff] %v440
        %s447 = scalar_lea.vmem [#allocation1], 16
        %448 = vst [vmem:[%s447] ss:$2 sm:$0xff] %v441
        %v449 = vld.sshfl [vmem:[#allocation1] sm:$0xff pattern:$0x75316420]
        %v450 = vld.sshfl [vmem:[#allocation1 + $0x8] sm:$0xff pattern:$0x75316420]
        %v451 = vld.sshfl [vmem:[#allocation1 + $0x10] sm:$0xff pattern:$0x75316420]
        %452 = vrot.lane.b32.xlu0 %v449, 126
        %v453 = vpop.permute.xlu0 %452
        %454 = vrot.lane.b32.xlu0 %v450, 126
        %v455 = vpop.permute.xlu0 %454
        %456 = vrot.lane.b32.xlu0 %v451, 126
        %v457 = vpop.permute.xlu0 %456
        %vm458 = vcmask 1031168
        %v459 = vsel %vm458, %v453, %v455
        %v460 = vsel %vm458, %v455, %v457
        %v462 = vsel %vm326, %v443, 0
        %v464 = vsel %vm301, %v459, 0
        %v466 = vsel %vm301, %v460, 0
        %468 = vmatpush.msra.mxu0 0.0
        %469 = vmatpush.msra.mxu0 0.0
        %470 = vmatpush.msra.mxu0 0.0
        %471 = vmatpush.msra.mxu0 0.0
        %472 = vmatpush.msra.mxu0 0.0
        %473 = vmatpush.msra.mxu0 0.0
        %474 = vmatpush.msra.mxu0 0.0
        %475 = vmatpush.msra.mxu0 0.0
        %476 = vmatpush.msra.mxu0 0.0
        %477 = vmatpush.msra.mxu0 0.0
        %478 = vmatpush.msra.mxu0 0.0
        %479 = vmatpush.msra.mxu0 0.0
        %480 = vmatpush.msra.mxu0 0.0
        %481 = vmatpush.msra.mxu0 0.0
        %482 = vmatpush.msra.mxu0 0.0
        %483 = vmatpush.msra.mxu0 %v464
        %484 = vmatmul.f32.gmra.mxu0 %v462
        %v485 = vpop.f32.mrf.mxu0
        %v486 = vadd.f32 0.0, %v485
        %487 = vdwg.mxu0
        %488 = vmatpush.msra.mxu0 0.0
        %489 = vmatpush.msra.mxu0 0.0
        %490 = vmatpush.msra.mxu0 0.0
        %491 = vmatpush.msra.mxu0 0.0
        %492 = vmatpush.msra.mxu0 0.0
        %493 = vmatpush.msra.mxu0 0.0
        %494 = vmatpush.msra.mxu0 0.0
        %495 = vmatpush.msra.mxu0 0.0
        %496 = vmatpush.msra.mxu0 0.0
        %497 = vmatpush.msra.mxu0 0.0
        %498 = vmatpush.msra.mxu0 0.0
        %499 = vmatpush.msra.mxu0 0.0
        %500 = vmatpush.msra.mxu0 0.0
        %501 = vmatpush.msra.mxu0 0.0
        %502 = vmatpush.msra.mxu0 0.0
        %503 = vmatpush.msra.mxu0 %v466
        %504 = vmatmul.f32.gmra.mxu0 %v462
        %v505 = vpop.f32.mrf.mxu0
        %v506 = vadd.f32 0.0, %v505
        %507 = vdwg.mxu0
        %v508 = vadd.f32 %v403, %v486
        %v509 = vadd.f32 %v423, %v506
        %v510 = vld [vmem:[#allocation2] sm:$0xff]
        %v511 = vld [vmem:[#allocation2 + $0x8] sm:$0xf]
        %512 = vrot.lane.b32.xlu0 %v302, 16
        %v513 = vpop.permute.xlu0 %512
        %v514 = vrot.slane %v513, 4
        %vm515 = vcmask 130048
        %v516 = vsel %vm515, %v514, %v513
        %v519 = vmul.f32 %v510, %v516
        %v520 = vmul.f32 %v511, %v514
        %s521 = scalar_lea.vmem %s1, 12
        %v522 = vld [vmem:[%s521] sm:$0xf]
        %525 = vst [vmem:[#allocation1] ss:$2 sm:$0xff] %v519
        %s526 = scalar_lea.vmem [#allocation1], 16
        %527 = vst [vmem:[%s526] ss:$2 sm:$0xff] %v520
        %v528 = vld.sshfl [vmem:[#allocation1] sm:$0xff pattern:$0x75316420]
        %v529 = vld.sshfl [vmem:[#allocation1 + $0x8] sm:$0xff pattern:$0x75316420]
        %v530 = vld.sshfl [vmem:[#allocation1 + $0x10] sm:$0xff pattern:$0x75316420]
        %531 = vrot.lane.b32.xlu0 %v528, 112
        %v532 = vpop.permute.xlu0 %531
        %533 = vrot.lane.b32.xlu0 %v529, 112
        %v534 = vpop.permute.xlu0 %533
        %535 = vrot.lane.b32.xlu0 %v530, 112
        %v536 = vpop.permute.xlu0 %535
        %vm537 = vcmask 916480
        %v538 = vsel %vm537, %v532, %v534
        %v539 = vsel %vm537, %v534, %v536
        %v541 = vsel %vm326, %v522, 0
        %v543 = vsel %vm301, %v538, 0
        %v545 = vsel %vm301, %v539, 0
        %547 = vmatpush.msra.mxu0 0.0
        %548 = vmatpush.msra.mxu0 0.0
        %549 = vmatpush.msra.mxu0 0.0
        %550 = vmatpush.msra.mxu0 0.0
        %551 = vmatpush.msra.mxu0 0.0
        %552 = vmatpush.msra.mxu0 0.0
        %553 = vmatpush.msra.mxu0 0.0
        %554 = vmatpush.msra.mxu0 0.0
        %555 = vmatpush.msra.mxu0 0.0
        %556 = vmatpush.msra.mxu0 0.0
        %557 = vmatpush.msra.mxu0 0.0
        %558 = vmatpush.msra.mxu0 0.0
        %559 = vmatpush.msra.mxu0 0.0
        %560 = vmatpush.msra.mxu0 0.0
        %561 = vmatpush.msra.mxu0 0.0
        %562 = vmatpush.msra.mxu0 %v543
        %563 = vmatmul.f32.gmra.mxu0 %v541
        %v564 = vpop.f32.mrf.mxu0
        %v565 = vadd.f32 0.0, %v564
        %566 = vdwg.mxu0
        %567 = vmatpush.msra.mxu0 0.0
        %568 = vmatpush.msra.mxu0 0.0
        %569 = vmatpush.msra.mxu0 0.0
        %570 = vmatpush.msra.mxu0 0.0
        %571 = vmatpush.msra.mxu0 0.0
        %572 = vmatpush.msra.mxu0 0.0
        %573 = vmatpush.msra.mxu0 0.0
        %574 = vmatpush.msra.mxu0 0.0
        %575 = vmatpush.msra.mxu0 0.0
        %576 = vmatpush.msra.mxu0 0.0
        %577 = vmatpush.msra.mxu0 0.0
        %578 = vmatpush.msra.mxu0 0.0
        %579 = vmatpush.msra.mxu0 0.0
        %580 = vmatpush.msra.mxu0 0.0
        %581 = vmatpush.msra.mxu0 0.0
        %582 = vmatpush.msra.mxu0 %v545
        %583 = vmatmul.f32.gmra.mxu0 %v541
        %v584 = vpop.f32.mrf.mxu0
        %v585 = vadd.f32 0.0, %v584
        %586 = vdwg.mxu0
        %v587 = vadd.f32 %v508, %v565
        %v588 = vadd.f32 %v509, %v585
        %v589 = vld [vmem:[#allocation2] sm:$0xff]
        %v590 = vld [vmem:[#allocation2 + $0x8] sm:$0xf]
        %s591 = scalar_lea.vmem %s1, 16
        %v592 = vld [vmem:[%s591] sm:$0xf]
        %595 = vst [vmem:[#allocation1] ss:$2 sm:$0xff] %v589
        %s596 = scalar_lea.vmem [#allocation1], 16
        %597 = vst [vmem:[%s596] ss:$2 sm:$0xff] %v590
        %v598 = vld.sshfl [vmem:[#allocation1] sm:$0xff pattern:$0x75316420]
        %v599 = vld.sshfl [vmem:[#allocation1 + $0x8] sm:$0xff pattern:$0x75316420]
        %v600 = vld.sshfl [vmem:[#allocation1 + $0x10] sm:$0xff pattern:$0x75316420]
        %601 = vrot.lane.b32.xlu0 %v598, 111
        %v602 = vpop.permute.xlu0 %601
        %603 = vrot.lane.b32.xlu0 %v599, 111
        %v604 = vpop.permute.xlu0 %603
        %605 = vrot.lane.b32.xlu0 %v600, 111
        %v606 = vpop.permute.xlu0 %605
        %vm607 = vcmask 908288
        %v608 = vsel %vm607, %v602, %v604
        %v609 = vsel %vm607, %v604, %v606
        %v611 = vsel %vm326, %v592, 0
        %v613 = vsel %vm301, %v608, 0
        %v615 = vsel %vm301, %v609, 0
        %617 = vmatpush.msra.mxu0 0.0
        %618 = vmatpush.msra.mxu0 0.0
        %619 = vmatpush.msra.mxu0 0.0
        %620 = vmatpush.msra.mxu0 0.0
        %621 = vmatpush.msra.mxu0 0.0
        %622 = vmatpush.msra.mxu0 0.0
        %623 = vmatpush.msra.mxu0 0.0
        %624 = vmatpush.msra.mxu0 0.0
        %625 = vmatpush.msra.mxu0 0.0
        %626 = vmatpush.msra.mxu0 0.0
        %627 = vmatpush.msra.mxu0 0.0
        %628 = vmatpush.msra.mxu0 0.0
        %629 = vmatpush.msra.mxu0 0.0
        %630 = vmatpush.msra.mxu0 0.0
        %631 = vmatpush.msra.mxu0 0.0
        %632 = vmatpush.msra.mxu0 %v613
        %633 = vmatmul.f32.gmra.mxu0 %v611
        %v634 = vpop.f32.mrf.mxu0
        %v635 = vadd.f32 0.0, %v634
        %636 = vdwg.mxu0
        %637 = vmatpush.msra.mxu0 0.0
        %638 = vmatpush.msra.mxu0 0.0
        %639 = vmatpush.msra.mxu0 0.0
        %640 = vmatpush.msra.mxu0 0.0
        %641 = vmatpush.msra.mxu0 0.0
        %642 = vmatpush.msra.mxu0 0.0
        %643 = vmatpush.msra.mxu0 0.0
        %644 = vmatpush.msra.mxu0 0.0
        %645 = vmatpush.msra.mxu0 0.0
        %646 = vmatpush.msra.mxu0 0.0
        %647 = vmatpush.msra.mxu0 0.0
        %648 = vmatpush.msra.mxu0 0.0
        %649 = vmatpush.msra.mxu0 0.0
        %650 = vmatpush.msra.mxu0 0.0
        %651 = vmatpush.msra.mxu0 0.0
        %652 = vmatpush.msra.mxu0 %v615
        %653 = vmatmul.f32.gmra.mxu0 %v611
        %v654 = vpop.f32.mrf.mxu0
        %v655 = vadd.f32 0.0, %v654
        %656 = vdwg.mxu0
        %v657 = vadd.f32 %v587, %v635
        %v658 = vadd.f32 %v588, %v655
        %v659 = vld [vmem:[#allocation2] sm:$0xff]
        %v660 = vld [vmem:[#allocation2 + $0x8] sm:$0xf]
        %661 = vrot.lane.b32.xlu0 %v432, 18
        %v662 = vpop.permute.xlu0 %661
        %v663 = vrot.slane %v662, 4
        %vm664 = vcmask 146432
        %v665 = vsel %vm664, %v663, %v662
        %v668 = vmul.f32 %v659, %v665
        %v669 = vmul.f32 %v660, %v663
        %s670 = scalar_lea.vmem %s1, 20
        %v671 = vld [vmem:[%s670] sm:$0xf]
        %674 = vst [vmem:[#allocation1] ss:$2 sm:$0xff] %v668
        %s675 = scalar_lea.vmem [#allocation1], 16
        %676 = vst [vmem:[%s675] ss:$2 sm:$0xff] %v669
        %v677 = vld.sshfl [vmem:[#allocation1] sm:$0xff pattern:$0x75316420]
        %v678 = vld.sshfl [vmem:[#allocation1 + $0x8] sm:$0xff pattern:$0x75316420]
        %v679 = vld.sshfl [vmem:[#allocation1 + $0x10] sm:$0xff pattern:$0x75316420]
        %680 = vrot.lane.b32.xlu0 %v677, 110
        %v681 = vpop.permute.xlu0 %680
        %682 = vrot.lane.b32.xlu0 %v678, 110
        %v683 = vpop.permute.xlu0 %682
        %684 = vrot.lane.b32.xlu0 %v679, 110
        %v685 = vpop.permute.xlu0 %684
        %vm686 = vcmask 900096
        %v687 = vsel %vm686, %v681, %v683
        %v688 = vsel %vm686, %v683, %v685
        %v690 = vsel %vm326, %v671, 0
        %v692 = vsel %vm301, %v687, 0
        %v694 = vsel %vm301, %v688, 0
        %696 = vmatpush.msra.mxu0 0.0
        %697 = vmatpush.msra.mxu0 0.0
        %698 = vmatpush.msra.mxu0 0.0
        %699 = vmatpush.msra.mxu0 0.0
        %700 = vmatpush.msra.mxu0 0.0
        %701 = vmatpush.msra.mxu0 0.0
        %702 = vmatpush.msra.mxu0 0.0
        %703 = vmatpush.msra.mxu0 0.0
        %704 = vmatpush.msra.mxu0 0.0
        %705 = vmatpush.msra.mxu0 0.0
        %706 = vmatpush.msra.mxu0 0.0
        %707 = vmatpush.msra.mxu0 0.0
        %708 = vmatpush.msra.mxu0 0.0
        %709 = vmatpush.msra.mxu0 0.0
        %710 = vmatpush.msra.mxu0 0.0
        %711 = vmatpush.msra.mxu0 %v692
        %712 = vmatmul.f32.gmra.mxu0 %v690
        %v713 = vpop.f32.mrf.mxu0
        %v714 = vadd.f32 0.0, %v713
        %715 = vdwg.mxu0
        %716 = vmatpush.msra.mxu0 0.0
        %717 = vmatpush.msra.mxu0 0.0
        %718 = vmatpush.msra.mxu0 0.0
        %719 = vmatpush.msra.mxu0 0.0
        %720 = vmatpush.msra.mxu0 0.0
        %721 = vmatpush.msra.mxu0 0.0
        %722 = vmatpush.msra.mxu0 0.0
        %723 = vmatpush.msra.mxu0 0.0
        %724 = vmatpush.msra.mxu0 0.0
        %725 = vmatpush.msra.mxu0 0.0
        %726 = vmatpush.msra.mxu0 0.0
        %727 = vmatpush.msra.mxu0 0.0
        %728 = vmatpush.msra.mxu0 0.0
        %729 = vmatpush.msra.mxu0 0.0
        %730 = vmatpush.msra.mxu0 0.0
        %731 = vmatpush.msra.mxu0 %v694
        %732 = vmatmul.f32.gmra.mxu0 %v690
        %v733 = vpop.f32.mrf.mxu0
        %v734 = vadd.f32 0.0, %v733
        %735 = vdwg.mxu0
        %v736 = vadd.f32 %v657, %v714
        %v737 = vadd.f32 %v658, %v734
        %v738 = vld [vmem:[#allocation2] sm:$0xff]
        %v739 = vld [vmem:[#allocation2 + $0x8] sm:$0xf]
        %740 = vrot.lane.b32.xlu0 %v302, 32
        %v741 = vpop.permute.xlu0 %740
        %v742 = vrot.slane %v741, 4
        %vm743 = vcmask 261120
        %v744 = vsel %vm743, %v742, %v741
        %v747 = vmul.f32 %v738, %v744
        %v748 = vmul.f32 %v739, %v742
        %s749 = scalar_lea.vmem %s1, 24
        %v750 = vld [vmem:[%s749] sm:$0xf]
        %753 = vst [vmem:[#allocation1] ss:$2 sm:$0xff] %v747
        %s754 = scalar_lea.vmem [#allocation1], 16
        %755 = vst [vmem:[%s754] ss:$2 sm:$0xff] %v748
        %v756 = vld.sshfl [vmem:[#allocation1] sm:$0xff pattern:$0x75316420]
        %v757 = vld.sshfl [vmem:[#allocation1 + $0x8] sm:$0xff pattern:$0x75316420]
        %v758 = vld.sshfl [vmem:[#allocation1 + $0x10] sm:$0xff pattern:$0x75316420]
        %759 = vrot.lane.b32.xlu0 %v756, 96
        %v760 = vpop.permute.xlu0 %759
        %761 = vrot.lane.b32.xlu0 %v757, 96
        %v762 = vpop.permute.xlu0 %761
        %763 = vrot.lane.b32.xlu0 %v758, 96
        %v764 = vpop.permute.xlu0 %763
        %vm765 = vcmask 785408
        %v766 = vsel %vm765, %v760, %v762
        %v767 = vsel %vm765, %v762, %v764
        %v769 = vsel %vm326, %v750, 0
        %v771 = vsel %vm301, %v766, 0
        %v773 = vsel %vm301, %v767, 0
        %775 = vmatpush.msra.mxu0 0.0
        %776 = vmatpush.msra.mxu0 0.0
        %777 = vmatpush.msra.mxu0 0.0
        %778 = vmatpush.msra.mxu0 0.0
        %779 = vmatpush.msra.mxu0 0.0
        %780 = vmatpush.msra.mxu0 0.0
        %781 = vmatpush.msra.mxu0 0.0
        %782 = vmatpush.msra.mxu0 0.0
        %783 = vmatpush.msra.mxu0 0.0
        %784 = vmatpush.msra.mxu0 0.0
        %785 = vmatpush.msra.mxu0 0.0
        %786 = vmatpush.msra.mxu0 0.0
        %787 = vmatpush.msra.mxu0 0.0
        %788 = vmatpush.msra.mxu0 0.0
        %789 = vmatpush.msra.mxu0 0.0
        %790 = vmatpush.msra.mxu0 %v771
        %791 = vmatmul.f32.gmra.mxu0 %v769
        %v792 = vpop.f32.mrf.mxu0
        %v793 = vadd.f32 0.0, %v792
        %794 = vdwg.mxu0
        %795 = vmatpush.msra.mxu0 0.0
        %796 = vmatpush.msra.mxu0 0.0
        %797 = vmatpush.msra.mxu0 0.0
        %798 = vmatpush.msra.mxu0 0.0
        %799 = vmatpush.msra.mxu0 0.0
        %800 = vmatpush.msra.mxu0 0.0
        %801 = vmatpush.msra.mxu0 0.0
        %802 = vmatpush.msra.mxu0 0.0
        %803 = vmatpush.msra.mxu0 0.0
        %804 = vmatpush.msra.mxu0 0.0
        %805 = vmatpush.msra.mxu0 0.0
        %806 = vmatpush.msra.mxu0 0.0
        %807 = vmatpush.msra.mxu0 0.0
        %808 = vmatpush.msra.mxu0 0.0
        %809 = vmatpush.msra.mxu0 0.0
        %810 = vmatpush.msra.mxu0 %v773
        %811 = vmatmul.f32.gmra.mxu0 %v769
        %v812 = vpop.f32.mrf.mxu0
        %v813 = vadd.f32 0.0, %v812
        %814 = vdwg.mxu0
        %v815 = vadd.f32 %v736, %v793
        %v816 = vadd.f32 %v737, %v813
        %v817 = vld [vmem:[#allocation2] sm:$0xff]
        %v818 = vld [vmem:[#allocation2 + $0x8] sm:$0xf]
        %s819 = scalar_lea.vmem %s1, 28
        %v820 = vld [vmem:[%s819] sm:$0xf]
        %823 = vst [vmem:[#allocation1] ss:$2 sm:$0xff] %v817
        %s824 = scalar_lea.vmem [#allocation1], 16
        %825 = vst [vmem:[%s824] ss:$2 sm:$0xff] %v818
        %v826 = vld.sshfl [vmem:[#allocation1] sm:$0xff pattern:$0x75316420]
        %v827 = vld.sshfl [vmem:[#allocation1 + $0x8] sm:$0xff pattern:$0x75316420]
        %v828 = vld.sshfl [vmem:[#allocation1 + $0x10] sm:$0xff pattern:$0x75316420]
        %829 = vrot.lane.b32.xlu0 %v826, 95
        %v830 = vpop.permute.xlu0 %829
        %831 = vrot.lane.b32.xlu0 %v827, 95
        %v832 = vpop.permute.xlu0 %831
        %833 = vrot.lane.b32.xlu0 %v828, 95
        %v834 = vpop.permute.xlu0 %833
        %vm835 = vcmask 777216
        %v836 = vsel %vm835, %v830, %v832
        %v837 = vsel %vm835, %v832, %v834
        %v839 = vsel %vm326, %v820, 0
        %v841 = vsel %vm301, %v836, 0
        %v843 = vsel %vm301, %v837, 0
        %845 = vmatpush.msra.mxu0 0.0
        %846 = vmatpush.msra.mxu0 0.0
        %847 = vmatpush.msra.mxu0 0.0
        %848 = vmatpush.msra.mxu0 0.0
        %849 = vmatpush.msra.mxu0 0.0
        %850 = vmatpush.msra.mxu0 0.0
        %851 = vmatpush.msra.mxu0 0.0
        %852 = vmatpush.msra.mxu0 0.0
        %853 = vmatpush.msra.mxu0 0.0
        %854 = vmatpush.msra.mxu0 0.0
        %855 = vmatpush.msra.mxu0 0.0
        %856 = vmatpush.msra.mxu0 0.0
        %857 = vmatpush.msra.mxu0 0.0
        %858 = vmatpush.msra.mxu0 0.0
        %859 = vmatpush.msra.mxu0 0.0
        %860 = vmatpush.msra.mxu0 %v841
        %861 = vmatmul.f32.gmra.mxu0 %v839
        %v862 = vpop.f32.mrf.mxu0
        %v863 = vadd.f32 0.0, %v862
        %864 = vdwg.mxu0
        %865 = vmatpush.msra.mxu0 0.0
        %866 = vmatpush.msra.mxu0 0.0
        %867 = vmatpush.msra.mxu0 0.0
        %868 = vmatpush.msra.mxu0 0.0
        %869 = vmatpush.msra.mxu0 0.0
        %870 = vmatpush.msra.mxu0 0.0
        %871 = vmatpush.msra.mxu0 0.0
        %872 = vmatpush.msra.mxu0 0.0
        %873 = vmatpush.msra.mxu0 0.0
        %874 = vmatpush.msra.mxu0 0.0
        %875 = vmatpush.msra.mxu0 0.0
        %876 = vmatpush.msra.mxu0 0.0
        %877 = vmatpush.msra.mxu0 0.0
        %878 = vmatpush.msra.mxu0 0.0
        %879 = vmatpush.msra.mxu0 0.0
        %880 = vmatpush.msra.mxu0 %v843
        %881 = vmatmul.f32.gmra.mxu0 %v839
        %v882 = vpop.f32.mrf.mxu0
        %v883 = vadd.f32 0.0, %v882
        %884 = vdwg.mxu0
        %v885 = vadd.f32 %v815, %v863
        %v886 = vadd.f32 %v816, %v883
        %v887 = vld [vmem:[#allocation2] sm:$0xff]
        %v888 = vld [vmem:[#allocation2 + $0x8] sm:$0xf]
        %889 = vrot.lane.b32.xlu0 %v432, 34
        %v890 = vpop.permute.xlu0 %889
        %v891 = vrot.slane %v890, 4
        %vm892 = vcmask 277504
        %v893 = vsel %vm892, %v891, %v890
        %v896 = vmul.f32 %v887, %v893
        %v897 = vmul.f32 %v888, %v891
        %s898 = scalar_lea.vmem %s1, 32
        %v899 = vld [vmem:[%s898] sm:$0xf]
        %902 = vst [vmem:[#allocation1] ss:$2 sm:$0xff] %v896
        %s903 = scalar_lea.vmem [#allocation1], 16
        %904 = vst [vmem:[%s903] ss:$2 sm:$0xff] %v897
        %v905 = vld.sshfl [vmem:[#allocation1] sm:$0xff pattern:$0x75316420]
        %v906 = vld.sshfl [vmem:[#allocation1 + $0x8] sm:$0xff pattern:$0x75316420]
        %v907 = vld.sshfl [vmem:[#allocation1 + $0x10] sm:$0xff pattern:$0x75316420]
        %908 = vrot.lane.b32.xlu0 %v905, 94
        %v909 = vpop.permute.xlu0 %908
        %910 = vrot.lane.b32.xlu0 %v906, 94
        %v911 = vpop.permute.xlu0 %910
        %912 = vrot.lane.b32.xlu0 %v907, 94
        %v913 = vpop.permute.xlu0 %912
        %vm914 = vcmask 769024
        %v915 = vsel %vm914, %v909, %v911
        %v916 = vsel %vm914, %v911, %v913
        %v918 = vsel %vm326, %v899, 0
        %v920 = vsel %vm301, %v915, 0
        %v922 = vsel %vm301, %v916, 0
        %924 = vmatpush.msra.mxu0 0.0
        %925 = vmatpush.msra.mxu0 0.0
        %926 = vmatpush.msra.mxu0 0.0
        %927 = vmatpush.msra.mxu0 0.0
        %928 = vmatpush.msra.mxu0 0.0
        %929 = vmatpush.msra.mxu0 0.0
        %930 = vmatpush.msra.mxu0 0.0
        %931 = vmatpush.msra.mxu0 0.0
        %932 = vmatpush.msra.mxu0 0.0
        %933 = vmatpush.msra.mxu0 0.0
        %934 = vmatpush.msra.mxu0 0.0
        %935 = vmatpush.msra.mxu0 0.0
        %936 = vmatpush.msra.mxu0 0.0
        %937 = vmatpush.msra.mxu0 0.0
        %938 = vmatpush.msra.mxu0 0.0
        %939 = vmatpush.msra.mxu0 %v920
        %940 = vmatmul.f32.gmra.mxu0 %v918
        %v941 = vpop.f32.mrf.mxu0
        %v942 = vadd.f32 0.0, %v941
        %943 = vdwg.mxu0
        %944 = vmatpush.msra.mxu0 0.0
        %945 = vmatpush.msra.mxu0 0.0
        %946 = vmatpush.msra.mxu0 0.0
        %947 = vmatpush.msra.mxu0 0.0
        %948 = vmatpush.msra.mxu0 0.0
        %949 = vmatpush.msra.mxu0 0.0
        %950 = vmatpush.msra.mxu0 0.0
        %951 = vmatpush.msra.mxu0 0.0
        %952 = vmatpush.msra.mxu0 0.0
        %953 = vmatpush.msra.mxu0 0.0
        %954 = vmatpush.msra.mxu0 0.0
        %955 = vmatpush.msra.mxu0 0.0
        %956 = vmatpush.msra.mxu0 0.0
        %957 = vmatpush.msra.mxu0 0.0
        %958 = vmatpush.msra.mxu0 0.0
        %959 = vmatpush.msra.mxu0 %v922
        %960 = vmatmul.f32.gmra.mxu0 %v918
        %v961 = vpop.f32.mrf.mxu0
        %v962 = vadd.f32 0.0, %v961
        %963 = vdwg.mxu0
        %v964 = vadd.f32 %v885, %v942
        %v965 = vadd.f32 %v886, %v962
        %v966 = vld [vmem:[%s2] sm:$0xf]
        %968 = vset.pattern.permute.xlu0 0
        %969 = vperm.xlu0 %968, %v966
        %v970 = vpop.permute.xlu0 %969
        %v972 = vadd.f32 %v964, %v970
        %v973 = vadd.f32 %v965, %v970
        %v974 = vmax.f32 %v972, 0.0
        %v975 = vmax.f32 %v973, 0.0
        %v978 = vrot.slane %v975, 4
        %v979 = vsel %vm301, %v974, %v978
        %980 = vrot.lane.b32.xlu0 %v979, 17
        %v981 = vpop.permute.xlu0 %980
        %v982 = vrot.slane %v981, 4
        %v983 = vsel %vm285, %v982, %v981
        %986 = vst.msk [vmem:[#allocation2] sm:$0xff] %vm291, %v983
        %987 = vst.msk [vmem:[#allocation2 + $0x8] sm:$0xf] %vm293, %v982
        %v988 = vld [vmem:[#allocation2] sm:$0xff]
        %v989 = vld [vmem:[%s5] sm:$0x3]
        %v991 = vperm.slane %v989, 0
        %v992 = vperm.slane %v989, 1
        %v993 = vrot.slane %v992, 4
        %v994 = vsel %vm301, %v991, %v993
        %v996 = vmul.f32 %v988, %v994
        %v997 = vld [vmem:[%s3] sm:$0xf]
        %v998 = vld [vmem:[#allocation2 + $0x8] sm:$0xf]
        %s999 = scalar_lea.vmem %s3, 4
        %v1000 = vld [vmem:[%s999] sm:$0xf]
        %1003 = vst [vmem:[#allocation1] ss:$2 sm:$0xff] %v988
        %s1004 = scalar_lea.vmem [#allocation1], 16
        %1005 = vst [vmem:[%s1004] ss:$2 sm:$0xff] %v998
        %v1006 = vld.sshfl [vmem:[#allocation1] sm:$0xff pattern:$0x75316420]
        %v1007 = vld.sshfl [vmem:[#allocation1 + $0x8] sm:$0xff pattern:$0x75316420]
        %v1008 = vld.sshfl [vmem:[#allocation1 + $0x10] sm:$0xff pattern:$0x75316420]
        %1009 = vrot.lane.b32.xlu0 %v1006, 127
        %v1010 = vpop.permute.xlu0 %1009
        %1011 = vrot.lane.b32.xlu0 %v1007, 127
        %v1012 = vpop.permute.xlu0 %1011
        %1013 = vrot.lane.b32.xlu0 %v1008, 127
        %v1014 = vpop.permute.xlu0 %1013
        %v1015 = vsel %vm323, %v1010, %v1012
        %v1016 = vsel %vm323, %v1012, %v1014
        %v1018 = vsel %vm326, %v1000, 0
        %v1020 = vsel %vm301, %v1015, 0
        %v1022 = vsel %vm301, %v1016, 0
        %1024 = vmatpush.msra.mxu0 0.0
        %1025 = vmatpush.msra.mxu0 0.0
        %1026 = vmatpush.msra.mxu0 0.0
        %1027 = vmatpush.msra.mxu0 0.0
        %1028 = vmatpush.msra.mxu0 0.0
        %1029 = vmatpush.msra.mxu0 0.0
        %1030 = vmatpush.msra.mxu0 0.0
        %1031 = vmatpush.msra.mxu0 0.0
        %1032 = vmatpush.msra.mxu0 0.0
        %1033 = vmatpush.msra.mxu0 0.0
        %1034 = vmatpush.msra.mxu0 0.0
        %1035 = vmatpush.msra.mxu0 0.0
        %1036 = vmatpush.msra.mxu0 0.0
        %1037 = vmatpush.msra.mxu0 0.0
        %1038 = vmatpush.msra.mxu0 0.0
        %1039 = vmatpush.msra.mxu0 %v1020
        %1040 = vmatmul.f32.gmra.mxu0 %v1018
        %v1041 = vpop.f32.mrf.mxu0
        %v1042 = vadd.f32 0.0, %v1041
        %1043 = vdwg.mxu0
        %1044 = vmatpush.msra.mxu0 0.0
        %1045 = vmatpush.msra.mxu0 0.0
        %1046 = vmatpush.msra.mxu0 0.0
        %1047 = vmatpush.msra.mxu0 0.0
        %1048 = vmatpush.msra.mxu0 0.0
        %1049 = vmatpush.msra.mxu0 0.0
        %1050 = vmatpush.msra.mxu0 0.0
        %1051 = vmatpush.msra.mxu0 0.0
        %1052 = vmatpush.msra.mxu0 0.0
        %1053 = vmatpush.msra.mxu0 0.0
        %1054 = vmatpush.msra.mxu0 0.0
        %1055 = vmatpush.msra.mxu0 0.0
        %1056 = vmatpush.msra.mxu0 0.0
        %1057 = vmatpush.msra.mxu0 0.0
        %1058 = vmatpush.msra.mxu0 0.0
        %1059 = vmatpush.msra.mxu0 %v1022
        %1060 = vmatmul.f32.gmra.mxu0 %v1018
        %v1061 = vpop.f32.mrf.mxu0
        %v1062 = vadd.f32 0.0, %v1061
        %1063 = vdwg.mxu0
        %1065 = vst [vmem:[#allocation1] ss:$2 sm:$0xff] %v996
        %v1066 = vld.sshfl [vmem:[#allocation1] sm:$0xff pattern:$0x75316420]
        %v1067 = vld.sshfl [vmem:[#allocation1 + $0x8] sm:$0xff pattern:$0x75316420]
        %v1069 = vsel %vm326, %v997, 0
        %v1071 = vsel %vm301, %v1066, 0
        %v1073 = vsel %vm301, %v1067, 0
        %1075 = vmatpush.msra.mxu0 0.0
        %1076 = vmatpush.msra.mxu0 0.0
        %1077 = vmatpush.msra.mxu0 0.0
        %1078 = vmatpush.msra.mxu0 0.0
        %1079 = vmatpush.msra.mxu0 0.0
        %1080 = vmatpush.msra.mxu0 0.0
        %1081 = vmatpush.msra.mxu0 0.0
        %1082 = vmatpush.msra.mxu0 0.0
        %1083 = vmatpush.msra.mxu0 0.0
        %1084 = vmatpush.msra.mxu0 0.0
        %1085 = vmatpush.msra.mxu0 0.0
        %1086 = vmatpush.msra.mxu0 0.0
        %1087 = vmatpush.msra.mxu0 0.0
        %1088 = vmatpush.msra.mxu0 0.0
        %1089 = vmatpush.msra.mxu0 0.0
        %1090 = vmatpush.msra.mxu0 %v1071
        %1091 = vmatmul.f32.gmra.mxu0 %v1069
        %v1092 = vpop.f32.mrf.mxu0
        %v1093 = vadd.f32 %v1042, %v1092
        %1094 = vdwg.mxu0
        %1095 = vmatpush.msra.mxu0 0.0
        %1096 = vmatpush.msra.mxu0 0.0
        %1097 = vmatpush.msra.mxu0 0.0
        %1098 = vmatpush.msra.mxu0 0.0
        %1099 = vmatpush.msra.mxu0 0.0
        %1100 = vmatpush.msra.mxu0 0.0
        %1101 = vmatpush.msra.mxu0 0.0
        %1102 = vmatpush.msra.mxu0 0.0
        %1103 = vmatpush.msra.mxu0 0.0
        %1104 = vmatpush.msra.mxu0 0.0
        %1105 = vmatpush.msra.mxu0 0.0
        %1106 = vmatpush.msra.mxu0 0.0
        %1107 = vmatpush.msra.mxu0 0.0
        %1108 = vmatpush.msra.mxu0 0.0
        %1109 = vmatpush.msra.mxu0 0.0
        %1110 = vmatpush.msra.mxu0 %v1073
        %1111 = vmatmul.f32.gmra.mxu0 %v1069
        %v1112 = vpop.f32.mrf.mxu0
        %v1113 = vadd.f32 %v1062, %v1112
        %1114 = vdwg.mxu0
        %v1115 = vld [vmem:[#allocation2] sm:$0xff]
        %v1116 = vld [vmem:[#allocation2 + $0x8] sm:$0xf]
        %v1117 = vld [vmem:[%s6] sm:$0x3]
        %v1119 = vperm.slane %v1117, 0
        %v1120 = vperm.slane %v1117, 1
        %v1121 = vrot.slane %v1120, 4
        %v1122 = vsel %vm301, %v1119, %v1121
        %1123 = vrot.lane.b32.xlu0 %v1122, 2
        %v1124 = vpop.permute.xlu0 %1123
        %v1125 = vrot.slane %v1124, 4
        %v1126 = vsel %vm436, %v1125, %v1124
        %v1129 = vmul.f32 %v1115, %v1126
        %v1130 = vmul.f32 %v1116, %v1125
        %s1131 = scalar_lea.vmem %s3, 8
        %v1132 = vld [vmem:[%s1131] sm:$0xf]
        %1135 = vst [vmem:[#allocation1] ss:$2 sm:$0xff] %v1129
        %s1136 = scalar_lea.vmem [#allocation1], 16
        %1137 = vst [vmem:[%s1136] ss:$2 sm:$0xff] %v1130
        %v1138 = vld.sshfl [vmem:[#allocation1] sm:$0xff pattern:$0x75316420]
        %v1139 = vld.sshfl [vmem:[#allocation1 + $0x8] sm:$0xff pattern:$0x75316420]
        %v1140 = vld.sshfl [vmem:[#allocation1 + $0x10] sm:$0xff pattern:$0x75316420]
        %1141 = vrot.lane.b32.xlu0 %v1138, 126
        %v1142 = vpop.permute.xlu0 %1141
        %1143 = vrot.lane.b32.xlu0 %v1139, 126
        %v1144 = vpop.permute.xlu0 %1143
        %1145 = vrot.lane.b32.xlu0 %v1140, 126
        %v1146 = vpop.permute.xlu0 %1145
        %v1147 = vsel %vm458, %v1142, %v1144
        %v1148 = vsel %vm458, %v1144, %v1146
        %v1150 = vsel %vm326, %v1132, 0
        %v1152 = vsel %vm301, %v1147, 0
        %v1154 = vsel %vm301, %v1148, 0
        %1156 = vmatpush.msra.mxu0 0.0
        %1157 = vmatpush.msra.mxu0 0.0
        %1158 = vmatpush.msra.mxu0 0.0
        %1159 = vmatpush.msra.mxu0 0.0
        %1160 = vmatpush.msra.mxu0 0.0
        %1161 = vmatpush.msra.mxu0 0.0
        %1162 = vmatpush.msra.mxu0 0.0
        %1163 = vmatpush.msra.mxu0 0.0
        %1164 = vmatpush.msra.mxu0 0.0
        %1165 = vmatpush.msra.mxu0 0.0
        %1166 = vmatpush.msra.mxu0 0.0
        %1167 = vmatpush.msra.mxu0 0.0
        %1168 = vmatpush.msra.mxu0 0.0
        %1169 = vmatpush.msra.mxu0 0.0
        %1170 = vmatpush.msra.mxu0 0.0
        %1171 = vmatpush.msra.mxu0 %v1152
        %1172 = vmatmul.f32.gmra.mxu0 %v1150
        %v1173 = vpop.f32.mrf.mxu0
        %v1174 = vadd.f32 0.0, %v1173
        %1175 = vdwg.mxu0
        %1176 = vmatpush.msra.mxu0 0.0
        %1177 = vmatpush.msra.mxu0 0.0
        %1178 = vmatpush.msra.mxu0 0.0
        %1179 = vmatpush.msra.mxu0 0.0
        %1180 = vmatpush.msra.mxu0 0.0
        %1181 = vmatpush.msra.mxu0 0.0
        %1182 = vmatpush.msra.mxu0 0.0
        %1183 = vmatpush.msra.mxu0 0.0
        %1184 = vmatpush.msra.mxu0 0.0
        %1185 = vmatpush.msra.mxu0 0.0
        %1186 = vmatpush.msra.mxu0 0.0
        %1187 = vmatpush.msra.mxu0 0.0
        %1188 = vmatpush.msra.mxu0 0.0
        %1189 = vmatpush.msra.mxu0 0.0
        %1190 = vmatpush.msra.mxu0 0.0
        %1191 = vmatpush.msra.mxu0 %v1154
        %1192 = vmatmul.f32.gmra.mxu0 %v1150
        %v1193 = vpop.f32.mrf.mxu0
        %v1194 = vadd.f32 0.0, %v1193
        %1195 = vdwg.mxu0
        %v1196 = vadd.f32 %v1093, %v1174
        %v1197 = vadd.f32 %v1113, %v1194
        %v1198 = vld [vmem:[#allocation2] sm:$0xff]
        %v1199 = vld [vmem:[#allocation2 + $0x8] sm:$0xf]
        %1200 = vrot.lane.b32.xlu0 %v994, 16
        %v1201 = vpop.permute.xlu0 %1200
        %v1202 = vrot.slane %v1201, 4
        %v1203 = vsel %vm515, %v1202, %v1201
        %v1206 = vmul.f32 %v1198, %v1203
        %v1207 = vmul.f32 %v1199, %v1202
        %s1208 = scalar_lea.vmem %s3, 12
        %v1209 = vld [vmem:[%s1208] sm:$0xf]
        %1212 = vst [vmem:[#allocation1] ss:$2 sm:$0xff] %v1206
        %s1213 = scalar_lea.vmem [#allocation1], 16
        %1214 = vst [vmem:[%s1213] ss:$2 sm:$0xff] %v1207
        %v1215 = vld.sshfl [vmem:[#allocation1] sm:$0xff pattern:$0x75316420]
        %v1216 = vld.sshfl [vmem:[#allocation1 + $0x8] sm:$0xff pattern:$0x75316420]
        %v1217 = vld.sshfl [vmem:[#allocation1 + $0x10] sm:$0xff pattern:$0x75316420]
        %1218 = vrot.lane.b32.xlu0 %v1215, 112
        %v1219 = vpop.permute.xlu0 %1218
        %1220 = vrot.lane.b32.xlu0 %v1216, 112
        %v1221 = vpop.permute.xlu0 %1220
        %1222 = vrot.lane.b32.xlu0 %v1217, 112
        %v1223 = vpop.permute.xlu0 %1222
        %v1224 = vsel %vm537, %v1219, %v1221
        %v1225 = vsel %vm537, %v1221, %v1223
        %v1227 = vsel %vm326, %v1209, 0
        %v1229 = vsel %vm301, %v1224, 0
        %v1231 = vsel %vm301, %v1225, 0
        %1233 = vmatpush.msra.mxu0 0.0
        %1234 = vmatpush.msra.mxu0 0.0
        %1235 = vmatpush.msra.mxu0 0.0
        %1236 = vmatpush.msra.mxu0 0.0
        %1237 = vmatpush.msra.mxu0 0.0
        %1238 = vmatpush.msra.mxu0 0.0
        %1239 = vmatpush.msra.mxu0 0.0
        %1240 = vmatpush.msra.mxu0 0.0
        %1241 = vmatpush.msra.mxu0 0.0
        %1242 = vmatpush.msra.mxu0 0.0
        %1243 = vmatpush.msra.mxu0 0.0
        %1244 = vmatpush.msra.mxu0 0.0
        %1245 = vmatpush.msra.mxu0 0.0
        %1246 = vmatpush.msra.mxu0 0.0
        %1247 = vmatpush.msra.mxu0 0.0
        %1248 = vmatpush.msra.mxu0 %v1229
        %1249 = vmatmul.f32.gmra.mxu0 %v1227
        %v1250 = vpop.f32.mrf.mxu0
        %v1251 = vadd.f32 0.0, %v1250
        %1252 = vdwg.mxu0
        %1253 = vmatpush.msra.mxu0 0.0
        %1254 = vmatpush.msra.mxu0 0.0
        %1255 = vmatpush.msra.mxu0 0.0
        %1256 = vmatpush.msra.mxu0 0.0
        %1257 = vmatpush.msra.mxu0 0.0
        %1258 = vmatpush.msra.mxu0 0.0
        %1259 = vmatpush.msra.mxu0 0.0
        %1260 = vmatpush.msra.mxu0 0.0
        %1261 = vmatpush.msra.mxu0 0.0
        %1262 = vmatpush.msra.mxu0 0.0
        %1263 = vmatpush.msra.mxu0 0.0
        %1264 = vmatpush.msra.mxu0 0.0
        %1265 = vmatpush.msra.mxu0 0.0
        %1266 = vmatpush.msra.mxu0 0.0
        %1267 = vmatpush.msra.mxu0 0.0
        %1268 = vmatpush.msra.mxu0 %v1231
        %1269 = vmatmul.f32.gmra.mxu0 %v1227
        %v1270 = vpop.f32.mrf.mxu0
        %v1271 = vadd.f32 0.0, %v1270
        %1272 = vdwg.mxu0
        %v1273 = vadd.f32 %v1196, %v1251
        %v1274 = vadd.f32 %v1197, %v1271
        %v1275 = vld [vmem:[#allocation2] sm:$0xff]
        %v1276 = vld [vmem:[#allocation2 + $0x8] sm:$0xf]
        %s1277 = scalar_lea.vmem %s3, 16
        %v1278 = vld [vmem:[%s1277] sm:$0xf]
        %1281 = vst [vmem:[#allocation1] ss:$2 sm:$0xff] %v1275
        %s1282 = scalar_lea.vmem [#allocation1], 16
        %1283 = vst [vmem:[%s1282] ss:$2 sm:$0xff] %v1276
        %v1284 = vld.sshfl [vmem:[#allocation1] sm:$0xff pattern:$0x75316420]
        %v1285 = vld.sshfl [vmem:[#allocation1 + $0x8] sm:$0xff pattern:$0x75316420]
        %v1286 = vld.sshfl [vmem:[#allocation1 + $0x10] sm:$0xff pattern:$0x75316420]
        %1287 = vrot.lane.b32.xlu0 %v1284, 111
        %v1288 = vpop.permute.xlu0 %1287
        %1289 = vrot.lane.b32.xlu0 %v1285, 111
        %v1290 = vpop.permute.xlu0 %1289
        %1291 = vrot.lane.b32.xlu0 %v1286, 111
        %v1292 = vpop.permute.xlu0 %1291
        %v1293 = vsel %vm607, %v1288, %v1290
        %v1294 = vsel %vm607, %v1290, %v1292
        %v1296 = vsel %vm326, %v1278, 0
        %v1298 = vsel %vm301, %v1293, 0
        %v1300 = vsel %vm301, %v1294, 0
        %1302 = vmatpush.msra.mxu0 0.0
        %1303 = vmatpush.msra.mxu0 0.0
        %1304 = vmatpush.msra.mxu0 0.0
        %1305 = vmatpush.msra.mxu0 0.0
        %1306 = vmatpush.msra.mxu0 0.0
        %1307 = vmatpush.msra.mxu0 0.0
        %1308 = vmatpush.msra.mxu0 0.0
        %1309 = vmatpush.msra.mxu0 0.0
        %1310 = vmatpush.msra.mxu0 0.0
        %1311 = vmatpush.msra.mxu0 0.0
        %1312 = vmatpush.msra.mxu0 0.0
        %1313 = vmatpush.msra.mxu0 0.0
        %1314 = vmatpush.msra.mxu0 0.0
        %1315 = vmatpush.msra.mxu0 0.0
        %1316 = vmatpush.msra.mxu0 0.0
        %1317 = vmatpush.msra.mxu0 %v1298
        %1318 = vmatmul.f32.gmra.mxu0 %v1296
        %v1319 = vpop.f32.mrf.mxu0
        %v1320 = vadd.f32 0.0, %v1319
        %1321 = vdwg.mxu0
        %1322 = vmatpush.msra.mxu0 0.0
        %1323 = vmatpush.msra.mxu0 0.0
        %1324 = vmatpush.msra.mxu0 0.0
        %1325 = vmatpush.msra.mxu0 0.0
        %1326 = vmatpush.msra.mxu0 0.0
        %1327 = vmatpush.msra.mxu0 0.0
        %1328 = vmatpush.msra.mxu0 0.0
        %1329 = vmatpush.msra.mxu0 0.0
        %1330 = vmatpush.msra.mxu0 0.0
        %1331 = vmatpush.msra.mxu0 0.0
        %1332 = vmatpush.msra.mxu0 0.0
        %1333 = vmatpush.msra.mxu0 0.0
        %1334 = vmatpush.msra.mxu0 0.0
        %1335 = vmatpush.msra.mxu0 0.0
        %1336 = vmatpush.msra.mxu0 0.0
        %1337 = vmatpush.msra.mxu0 %v1300
        %1338 = vmatmul.f32.gmra.mxu0 %v1296
        %v1339 = vpop.f32.mrf.mxu0
        %v1340 = vadd.f32 0.0, %v1339
        %1341 = vdwg.mxu0
        %v1342 = vadd.f32 %v1273, %v1320
        %v1343 = vadd.f32 %v1274, %v1340
        %v1344 = vld [vmem:[#allocation2] sm:$0xff]
        %v1345 = vld [vmem:[#allocation2 + $0x8] sm:$0xf]
        %1346 = vrot.lane.b32.xlu0 %v1122, 18
        %v1347 = vpop.permute.xlu0 %1346
        %v1348 = vrot.slane %v1347, 4
        %v1349 = vsel %vm664, %v1348, %v1347
        %v1352 = vmul.f32 %v1344, %v1349
        %v1353 = vmul.f32 %v1345, %v1348
        %s1354 = scalar_lea.vmem %s3, 20
        %v1355 = vld [vmem:[%s1354] sm:$0xf]
        %1358 = vst [vmem:[#allocation1] ss:$2 sm:$0xff] %v1352
        %s1359 = scalar_lea.vmem [#allocation1], 16
        %1360 = vst [vmem:[%s1359] ss:$2 sm:$0xff] %v1353
        %v1361 = vld.sshfl [vmem:[#allocation1] sm:$0xff pattern:$0x75316420]
        %v1362 = vld.sshfl [vmem:[#allocation1 + $0x8] sm:$0xff pattern:$0x75316420]
        %v1363 = vld.sshfl [vmem:[#allocation1 + $0x10] sm:$0xff pattern:$0x75316420]
        %1364 = vrot.lane.b32.xlu0 %v1361, 110
        %v1365 = vpop.permute.xlu0 %1364
        %1366 = vrot.lane.b32.xlu0 %v1362, 110
        %v1367 = vpop.permute.xlu0 %1366
        %1368 = vrot.lane.b32.xlu0 %v1363, 110
        %v1369 = vpop.permute.xlu0 %1368
        %v1370 = vsel %vm686, %v1365, %v1367
        %v1371 = vsel %vm686, %v1367, %v1369
        %v1373 = vsel %vm326, %v1355, 0
        %v1375 = vsel %vm301, %v1370, 0
        %v1377 = vsel %vm301, %v1371, 0
        %1379 = vmatpush.msra.mxu0 0.0
        %1380 = vmatpush.msra.mxu0 0.0
        %1381 = vmatpush.msra.mxu0 0.0
        %1382 = vmatpush.msra.mxu0 0.0
        %1383 = vmatpush.msra.mxu0 0.0
        %1384 = vmatpush.msra.mxu0 0.0
        %1385 = vmatpush.msra.mxu0 0.0
        %1386 = vmatpush.msra.mxu0 0.0
        %1387 = vmatpush.msra.mxu0 0.0
        %1388 = vmatpush.msra.mxu0 0.0
        %1389 = vmatpush.msra.mxu0 0.0
        %1390 = vmatpush.msra.mxu0 0.0
        %1391 = vmatpush.msra.mxu0 0.0
        %1392 = vmatpush.msra.mxu0 0.0
        %1393 = vmatpush.msra.mxu0 0.0
        %1394 = vmatpush.msra.mxu0 %v1375
        %1395 = vmatmul.f32.gmra.mxu0 %v1373
        %v1396 = vpop.f32.mrf.mxu0
        %v1397 = vadd.f32 0.0, %v1396
        %1398 = vdwg.mxu0
        %1399 = vmatpush.msra.mxu0 0.0
        %1400 = vmatpush.msra.mxu0 0.0
        %1401 = vmatpush.msra.mxu0 0.0
        %1402 = vmatpush.msra.mxu0 0.0
        %1403 = vmatpush.msra.mxu0 0.0
        %1404 = vmatpush.msra.mxu0 0.0
        %1405 = vmatpush.msra.mxu0 0.0
        %1406 = vmatpush.msra.mxu0 0.0
        %1407 = vmatpush.msra.mxu0 0.0
        %1408 = vmatpush.msra.mxu0 0.0
        %1409 = vmatpush.msra.mxu0 0.0
        %1410 = vmatpush.msra.mxu0 0.0
        %1411 = vmatpush.msra.mxu0 0.0
        %1412 = vmatpush.msra.mxu0 0.0
        %1413 = vmatpush.msra.mxu0 0.0
        %1414 = vmatpush.msra.mxu0 %v1377
        %1415 = vmatmul.f32.gmra.mxu0 %v1373
        %v1416 = vpop.f32.mrf.mxu0
        %v1417 = vadd.f32 0.0, %v1416
        %1418 = vdwg.mxu0
        %v1419 = vadd.f32 %v1342, %v1397
        %v1420 = vadd.f32 %v1343, %v1417
        %v1421 = vld [vmem:[#allocation2] sm:$0xff]
        %v1422 = vld [vmem:[#allocation2 + $0x8] sm:$0xf]
        %1423 = vrot.lane.b32.xlu0 %v994, 32
        %v1424 = vpop.permute.xlu0 %1423
        %v1425 = vrot.slane %v1424, 4
        %v1426 = vsel %vm743, %v1425, %v1424
        %v1429 = vmul.f32 %v1421, %v1426
        %v1430 = vmul.f32 %v1422, %v1425
        %s1431 = scalar_lea.vmem %s3, 24
        %v1432 = vld [vmem:[%s1431] sm:$0xf]
        %1435 = vst [vmem:[#allocation1] ss:$2 sm:$0xff] %v1429
        %s1436 = scalar_lea.vmem [#allocation1], 16
        %1437 = vst [vmem:[%s1436] ss:$2 sm:$0xff] %v1430
        %v1438 = vld.sshfl [vmem:[#allocation1] sm:$0xff pattern:$0x75316420]
        %v1439 = vld.sshfl [vmem:[#allocation1 + $0x8] sm:$0xff pattern:$0x75316420]
        %v1440 = vld.sshfl [vmem:[#allocation1 + $0x10] sm:$0xff pattern:$0x75316420]
        %1441 = vrot.lane.b32.xlu0 %v1438, 96
        %v1442 = vpop.permute.xlu0 %1441
        %1443 = vrot.lane.b32.xlu0 %v1439, 96
        %v1444 = vpop.permute.xlu0 %1443
        %1445 = vrot.lane.b32.xlu0 %v1440, 96
        %v1446 = vpop.permute.xlu0 %1445
        %v1447 = vsel %vm765, %v1442, %v1444
        %v1448 = vsel %vm765, %v1444, %v1446
        %v1450 = vsel %vm326, %v1432, 0
        %v1452 = vsel %vm301, %v1447, 0
        %v1454 = vsel %vm301, %v1448, 0
        %1456 = vmatpush.msra.mxu0 0.0
        %1457 = vmatpush.msra.mxu0 0.0
        %1458 = vmatpush.msra.mxu0 0.0
        %1459 = vmatpush.msra.mxu0 0.0
        %1460 = vmatpush.msra.mxu0 0.0
        %1461 = vmatpush.msra.mxu0 0.0
        %1462 = vmatpush.msra.mxu0 0.0
        %1463 = vmatpush.msra.mxu0 0.0
        %1464 = vmatpush.msra.mxu0 0.0
        %1465 = vmatpush.msra.mxu0 0.0
        %1466 = vmatpush.msra.mxu0 0.0
        %1467 = vmatpush.msra.mxu0 0.0
        %1468 = vmatpush.msra.mxu0 0.0
        %1469 = vmatpush.msra.mxu0 0.0
        %1470 = vmatpush.msra.mxu0 0.0
        %1471 = vmatpush.msra.mxu0 %v1452
        %1472 = vmatmul.f32.gmra.mxu0 %v1450
        %v1473 = vpop.f32.mrf.mxu0
        %v1474 = vadd.f32 0.0, %v1473
        %1475 = vdwg.mxu0
        %1476 = vmatpush.msra.mxu0 0.0
        %1477 = vmatpush.msra.mxu0 0.0
        %1478 = vmatpush.msra.mxu0 0.0
        %1479 = vmatpush.msra.mxu0 0.0
        %1480 = vmatpush.msra.mxu0 0.0
        %1481 = vmatpush.msra.mxu0 0.0
        %1482 = vmatpush.msra.mxu0 0.0
        %1483 = vmatpush.msra.mxu0 0.0
        %1484 = vmatpush.msra.mxu0 0.0
        %1485 = vmatpush.msra.mxu0 0.0
        %1486 = vmatpush.msra.mxu0 0.0
        %1487 = vmatpush.msra.mxu0 0.0
        %1488 = vmatpush.msra.mxu0 0.0
        %1489 = vmatpush.msra.mxu0 0.0
        %1490 = vmatpush.msra.mxu0 0.0
        %1491 = vmatpush.msra.mxu0 %v1454
        %1492 = vmatmul.f32.gmra.mxu0 %v1450
        %v1493 = vpop.f32.mrf.mxu0
        %v1494 = vadd.f32 0.0, %v1493
        %1495 = vdwg.mxu0
        %v1496 = vadd.f32 %v1419, %v1474
        %v1497 = vadd.f32 %v1420, %v1494
        %v1498 = vld [vmem:[#allocation2] sm:$0xff]
        %v1499 = vld [vmem:[#allocation2 + $0x8] sm:$0xf]
        %s1500 = scalar_lea.vmem %s3, 28
        %v1501 = vld [vmem:[%s1500] sm:$0xf]
        %1504 = vst [vmem:[#allocation1] ss:$2 sm:$0xff] %v1498
        %s1505 = scalar_lea.vmem [#allocation1], 16
        %1506 = vst [vmem:[%s1505] ss:$2 sm:$0xff] %v1499
        %v1507 = vld.sshfl [vmem:[#allocation1] sm:$0xff pattern:$0x75316420]
        %v1508 = vld.sshfl [vmem:[#allocation1 + $0x8] sm:$0xff pattern:$0x75316420]
        %v1509 = vld.sshfl [vmem:[#allocation1 + $0x10] sm:$0xff pattern:$0x75316420]
        %1510 = vrot.lane.b32.xlu0 %v1507, 95
        %v1511 = vpop.permute.xlu0 %1510
        %1512 = vrot.lane.b32.xlu0 %v1508, 95
        %v1513 = vpop.permute.xlu0 %1512
        %1514 = vrot.lane.b32.xlu0 %v1509, 95
        %v1515 = vpop.permute.xlu0 %1514
        %v1516 = vsel %vm835, %v1511, %v1513
        %v1517 = vsel %vm835, %v1513, %v1515
        %v1519 = vsel %vm326, %v1501, 0
        %v1521 = vsel %vm301, %v1516, 0
        %v1523 = vsel %vm301, %v1517, 0
        %1525 = vmatpush.msra.mxu0 0.0
        %1526 = vmatpush.msra.mxu0 0.0
        %1527 = vmatpush.msra.mxu0 0.0
        %1528 = vmatpush.msra.mxu0 0.0
        %1529 = vmatpush.msra.mxu0 0.0
        %1530 = vmatpush.msra.mxu0 0.0
        %1531 = vmatpush.msra.mxu0 0.0
        %1532 = vmatpush.msra.mxu0 0.0
        %1533 = vmatpush.msra.mxu0 0.0
        %1534 = vmatpush.msra.mxu0 0.0
        %1535 = vmatpush.msra.mxu0 0.0
        %1536 = vmatpush.msra.mxu0 0.0
        %1537 = vmatpush.msra.mxu0 0.0
        %1538 = vmatpush.msra.mxu0 0.0
        %1539 = vmatpush.msra.mxu0 0.0
        %1540 = vmatpush.msra.mxu0 %v1521
        %1541 = vmatmul.f32.gmra.mxu0 %v1519
        %v1542 = vpop.f32.mrf.mxu0
        %v1543 = vadd.f32 0.0, %v1542
        %1544 = vdwg.mxu0
        %1545 = vmatpush.msra.mxu0 0.0
        %1546 = vmatpush.msra.mxu0 0.0
        %1547 = vmatpush.msra.mxu0 0.0
        %1548 = vmatpush.msra.mxu0 0.0
        %1549 = vmatpush.msra.mxu0 0.0
        %1550 = vmatpush.msra.mxu0 0.0
        %1551 = vmatpush.msra.mxu0 0.0
        %1552 = vmatpush.msra.mxu0 0.0
        %1553 = vmatpush.msra.mxu0 0.0
        %1554 = vmatpush.msra.mxu0 0.0
        %1555 = vmatpush.msra.mxu0 0.0
        %1556 = vmatpush.msra.mxu0 0.0
        %1557 = vmatpush.msra.mxu0 0.0
        %1558 = vmatpush.msra.mxu0 0.0
        %1559 = vmatpush.msra.mxu0 0.0
        %1560 = vmatpush.msra.mxu0 %v1523
        %1561 = vmatmul.f32.gmra.mxu0 %v1519
        %v1562 = vpop.f32.mrf.mxu0
        %v1563 = vadd.f32 0.0, %v1562
        %1564 = vdwg.mxu0
        %v1565 = vadd.f32 %v1496, %v1543
        %v1566 = vadd.f32 %v1497, %v1563
        %v1567 = vld [vmem:[#allocation2] sm:$0xff]
        %v1568 = vld [vmem:[#allocation2 + $0x8] sm:$0xf]
        %1569 = vrot.lane.b32.xlu0 %v1122, 34
        %v1570 = vpop.permute.xlu0 %1569
        %v1571 = vrot.slane %v1570, 4
        %v1572 = vsel %vm892, %v1571, %v1570
        %v1575 = vmul.f32 %v1567, %v1572
        %v1576 = vmul.f32 %v1568, %v1571
        %s1577 = scalar_lea.vmem %s3, 32
        %v1578 = vld [vmem:[%s1577] sm:$0xf]
        %1581 = vst [vmem:[#allocation1] ss:$2 sm:$0xff] %v1575
        %s1582 = scalar_lea.vmem [#allocation1], 16
        %1583 = vst [vmem:[%s1582] ss:$2 sm:$0xff] %v1576
        %v1584 = vld.sshfl [vmem:[#allocation1] sm:$0xff pattern:$0x75316420]
        %v1585 = vld.sshfl [vmem:[#allocation1 + $0x8] sm:$0xff pattern:$0x75316420]
        %v1586 = vld.sshfl [vmem:[#allocation1 + $0x10] sm:$0xff pattern:$0x75316420]
        %1587 = vrot.lane.b32.xlu0 %v1584, 94
        %v1588 = vpop.permute.xlu0 %1587
        %1589 = vrot.lane.b32.xlu0 %v1585, 94
        %v1590 = vpop.permute.xlu0 %1589
        %1591 = vrot.lane.b32.xlu0 %v1586, 94
        %v1592 = vpop.permute.xlu0 %1591
        %v1593 = vsel %vm914, %v1588, %v1590
        %v1594 = vsel %vm914, %v1590, %v1592
        %v1596 = vsel %vm326, %v1578, 0
        %v1598 = vsel %vm301, %v1593, 0
        %v1600 = vsel %vm301, %v1594, 0
        %1602 = vmatpush.msra.mxu0 0.0
        %1603 = vmatpush.msra.mxu0 0.0
        %1604 = vmatpush.msra.mxu0 0.0
        %1605 = vmatpush.msra.mxu0 0.0
        %1606 = vmatpush.msra.mxu0 0.0
        %1607 = vmatpush.msra.mxu0 0.0
        %1608 = vmatpush.msra.mxu0 0.0
        %1609 = vmatpush.msra.mxu0 0.0
        %1610 = vmatpush.msra.mxu0 0.0
        %1611 = vmatpush.msra.mxu0 0.0
        %1612 = vmatpush.msra.mxu0 0.0
        %1613 = vmatpush.msra.mxu0 0.0
        %1614 = vmatpush.msra.mxu0 0.0
        %1615 = vmatpush.msra.mxu0 0.0
        %1616 = vmatpush.msra.mxu0 0.0
        %1617 = vmatpush.msra.mxu0 %v1598
        %1618 = vmatmul.f32.gmra.mxu0 %v1596
        %v1619 = vpop.f32.mrf.mxu0
        %v1620 = vadd.f32 0.0, %v1619
        %1621 = vdwg.mxu0
        %1622 = vmatpush.msra.mxu0 0.0
        %1623 = vmatpush.msra.mxu0 0.0
        %1624 = vmatpush.msra.mxu0 0.0
        %1625 = vmatpush.msra.mxu0 0.0
        %1626 = vmatpush.msra.mxu0 0.0
        %1627 = vmatpush.msra.mxu0 0.0
        %1628 = vmatpush.msra.mxu0 0.0
        %1629 = vmatpush.msra.mxu0 0.0
        %1630 = vmatpush.msra.mxu0 0.0
        %1631 = vmatpush.msra.mxu0 0.0
        %1632 = vmatpush.msra.mxu0 0.0
        %1633 = vmatpush.msra.mxu0 0.0
        %1634 = vmatpush.msra.mxu0 0.0
        %1635 = vmatpush.msra.mxu0 0.0
        %1636 = vmatpush.msra.mxu0 0.0
        %1637 = vmatpush.msra.mxu0 %v1600
        %1638 = vmatmul.f32.gmra.mxu0 %v1596
        %v1639 = vpop.f32.mrf.mxu0
        %v1640 = vadd.f32 0.0, %v1639
        %1641 = vdwg.mxu0
        %v1642 = vadd.f32 %v1565, %v1620
        %v1643 = vadd.f32 %v1566, %v1640
        %v1644 = vld [vmem:[%s4] sm:$0xf]
        %1646 = vset.pattern.permute.xlu0 0
        %1647 = vperm.xlu0 %1646, %v1644
        %v1648 = vpop.permute.xlu0 %1647
        %v1650 = vadd.f32 %v1642, %v1648
        %v1651 = vadd.f32 %v1643, %v1648
        %v1652 = vmax.f32 %v1650, 0.0
        %v1653 = vmax.f32 %v1651, 0.0
        %v1656 = vrot.slane %v1653, 4
        %v1657 = vsel %vm301, %v1652, %v1656
        %v1659 = vadd.f32 %v277, %v1657
        %1660 = vst [vmem:[%s271] sm:$0xff] %v1659
        %s1661 = sand.u32 %s181, 1
        %s1662 = scalar_lea.sflag [#allocation4], %s1661
        %s1663 = sand.u32 %s181, 1
        %s1664 = smul.addr %s1663, 8
        %s1665 = scalar_lea.vmem [#allocation3], %s1664
        // Predicated region
        $region49: #{tpu_custom_call.1} parent=47 // pred_check
          %p1666 = pneg %p191
        $region50: #{tpu_custom_call.1} parent=47 // pred_check_branch
          %1668 = sbr.rel (%p1666) target = $region52
        $region51: #{tpu_custom_call.1} parent=47 // pred_region
          %1670 = vsyncadd %s1662, 0
          %s1671 = smul.addr %s21, 2
          %s1672 = smul.addr %s1671, 4
          %s1673 = scalar_lea.hbm %s7, %s1672
          %s1675 = sshll.u32 %s1665, 4
          %s1676 = int_to_ptr.vmem [resolvable:$true] %s1675
          %s1677 = sshll.u32 %s1673, 4
          %s1678 = int_to_ptr.hbm [resolvable:$true] %s1677
          %1680 = dma.vmem_to_hbm [thread:$0]  %s1676, 128, %s1678, %s1662
        $region52: #{tpu_custom_call.1} parent=47 // pred_fallthru
          _
      $region48: #{tpu_custom_call.1} parent=5 // pred_fallthru
        _
      %p1681 = scmp.le.s32.totalorder 2, %s16
      // Predicated region
      $region53: #{tpu_custom_call.1} parent=5 // pred_check
        %p1682 = pneg %p1681
      $region54: #{tpu_custom_call.1} parent=5 // pred_check_branch
        %1684 = sbr.rel (%p1682) target = $region56
      $region55: #{tpu_custom_call.1} parent=5 // pred_region
        %s1685 = ssub.s32 %s16, 2
        // Predicated region
        $region57: #{tpu_custom_call.1} parent=55 // pred_check
          %p1686 = pneg %p197
        $region58: #{tpu_custom_call.1} parent=55 // pred_check_branch
          %1688 = sbr.rel (%p1686) target = $region60
        $region59: #{tpu_custom_call.1} parent=55 // pred_region
          %s1689 = sand.u32 %s182, 1
          %s1690 = scalar_lea.sflag [#allocation4], %s1689
          %s1691 = sand.u32 %s182, 1
          %s1692 = smul.addr %s1691, 8
          %s1693 = scalar_lea.vmem [#allocation3], %s1692
          %1695 = dma.done %s1690, 128
        $region60: #{tpu_custom_call.1} parent=55 // pred_fallthru
          _
      $region56: #{tpu_custom_call.1} parent=5 // pred_fallthru
        _
    $region6: #{tpu_custom_call.1} parent=1 // loop_footer
      %s20 = sadd.s32 1, %s16
    $region7: #{tpu_custom_call.1} parent=1 // loop_footer_branch
      %15 = sbr.rel target = $region3
    $region8: #{tpu_custom_call.1} parent=1 // loop_exit
      _
    %1696 = vsyncpa [#allocation4], 1
    %s1697 = scalar_lea.sflag [#allocation4], 1
    %1698 = vsyncpa %s1697, 1

</llo_original>
